<compile_context>
chip_gen: v5e
topology: v5e:2x2
jax: 0.10.0
libtpu: 0.0.40
codegen_flags: <defaults>
</compile_context>

<pallas_src>
import functools

import jax
import jax.numpy as jnp
from jax.experimental import pallas as pl
from jax.experimental.pallas import tpu as pltpu


def _round_up(x, m):
    return (x + m - 1) // m * m


# ------------- fused conv3x3 (pad=1) + bias + ReLU [+ 2x2/2 maxpool], NHWC -------------

def _conv_kernel(x_ref, xtop_ref, xbot_ref, w_ref, b_ref, o_ref,
                 xcat_ref, prow_ref, *, kh, fuse_pool):
    # x_ref:    (1, TH, W, Cin)        bf16  current row band
    # xtop_ref: (1, 1,  W, Cin)        bf16  row above the band (clamped at image top)
    # xbot_ref: (1, 1,  W, Cin)        bf16  row below the band (clamped at image bottom)
    # w_ref:    (kh, 3*Cin, Cout)      bf16  pre-reshaped: [dh, dw*Cin+cin, cout]
    # b_ref:    (1, Cout)              f32
    # o_ref:    (1, TH, W, Cout) or (1, TH//2, W//2, Cout)  bf16
    # xcat_ref: (TH+kh-1, Wr, 3*Cin)   bf16  width-im2col staging tile
    # prow_ref: (W, Cout)              f32   tiny scratch for the column max of the pool
    _, TH, W, Cin = x_ref.shape
    Cout = o_ref.shape[-1]
    Wr = xcat_ref.shape[1]
    K = 3 * Cin
    HB = 2                                   # output rows per inner step
    koff = kh // 2                           # 1 if kh == 3 else 0
    i = pl.program_id(1)
    last = pl.num_programs(1) - 1
    cdt = x_ref.dtype

    # ---- stage the width-im2col tile: xcat[hp, w, dw*Cin:(dw+1)*Cin] = x_pad[hp, w+dw-1]
    def put_rows(hp0, rows, nr):
        xcat_ref[pl.ds(hp0, nr), 0:W, Cin:2 * Cin] = rows                    # dw = 1
        xcat_ref[pl.ds(hp0, nr), 1:W, 0:Cin] = rows[:, :W - 1, :]            # dw = 0
        xcat_ref[pl.ds(hp0, nr), 0:W - 1, 2 * Cin:K] = rows[:, 1:, :]        # dw = 2

    # zero only the two pad columns (everything else is overwritten every step;
    # the Wr-W alignment columns feed only discarded output rows)
    zc = jnp.zeros((TH + kh - 1, 1, Cin), cdt)
    xcat_ref[:, 0:1, 0:Cin] = zc
    xcat_ref[:, W - 1:W, 2 * Cin:K] = zc

    put_rows(koff, x_ref[0], TH)
    if kh == 3:
        zrow = jnp.zeros((1, W, K), cdt)

        @pl.when(i > 0)
        def _():
            put_rows(0, xtop_ref[0], 1)

        @pl.when(i == 0)
        def _():
            xcat_ref[0:1, 0:W, :] = zrow          # zeros at the image top

        @pl.when(i < last)
        def _():
            put_rows(TH + 1, xbot_ref[0], 1)

        @pl.when(i == last)
        def _():
            xcat_ref[TH + 1:TH + 2, 0:W, :] = zrow  # zeros at the image bottom

    bias = b_ref[...]                              # (1, Cout) f32, hoisted

    # ---- HB output rows per step: kh MXU matmuls with K = 3*Cin, f32 value accumulator
    @pl.loop(0, TH // HB)
    def _(blk):
        h0 = blk * HB
        acc = jnp.zeros((HB * Wr, Cout), jnp.float32)
        for dh in range(kh):                       # static, <= 3
            lhs = xcat_ref[pl.ds(h0 + dh, HB), :, :]
            lhs = lhs.reshape(HB * Wr, K)          # free: Wr is a multiple of 16
            acc = acc + jnp.dot(lhs, w_ref[dh], preferred_element_type=jnp.float32)
        y = acc.reshape(HB, Wr, Cout)[:, :W, :]
        y = jnp.maximum(y + bias, 0.0)             # bias + ReLU, f32
        if not fuse_pool:
            o_ref[0, pl.ds(h0, HB), :, :] = y.astype(o_ref.dtype)
        else:
            Wo = W // 2
            prow_ref[...] = jnp.maximum(y[0], y[1])          # row max on register values
            cmax = jnp.maximum(prow_ref[pl.ds(0, Wo, stride=2), :],
                               prow_ref[pl.ds(1, Wo, stride=2), :])
            o_ref[0, pl.ds(blk, 1), :, :] = cmax[None, :, :].astype(o_ref.dtype)


def _pick_tile_h(H, W, Cin, Cout, kh, fuse_pool, n_batch, budget=24 << 20):
    """Largest even divisor of H whose per-step VMEM footprint fits the byte budget."""
    Wr = _round_up(W, 16)
    cap = min(H, 64)
    if n_batch < 2:
        cap = min(cap, max(2, H // 2))      # keep >=2 grid steps for megacore when N == 1
    best = 2
    for th in range(2, cap + 1, 2):
        if H % th:
            continue
        oh, ow = (th // 2, W // 2) if fuse_pool else (th, W)
        use = 0
        use += 2 * th * W * Cin * 2                        # input band (double-buffered)
        use += 2 * 2 * W * Cin * 2                         # halo rows
        use += 2 * oh * ow * Cout * 2                      # output band
        use += 2 * (kh * 3 * Cin * Cout * 2 + Cout * 4)    # weights + bias
        use += (th + kh - 1) * Wr * 3 * Cin * 2            # xcat staging tile
        use += W * Cout * 4                                # pool row scratch
        use += 4 * 2 * Wr * Cout * 4                       # in-flight f32 acc / temps
        if use <= budget:
            best = th
    return best


def conv3x3_relu(x, wk, b, *, kh=3, fuse_pool=False, tile_h=None):
    """Fused 3x3 conv (padding=1) + bias + ReLU (+ optional 2x2/2 maxpool).

    x:  (N, H, W, Cin) bf16
    wk: (kh, 3*Cin, Cout) bf16, pre-reshaped so K index = dw*Cin + cin
    b:  (1, Cout) f32
    Returns (N, H, W, Cout) bf16, or (N, H//2, W//2, Cout) bf16 if fuse_pool.
    """
    N, H, W, Cin = x.shape
    Cout = wk.shape[-1]
    assert wk.shape == (kh, 3 * Cin, Cout)
    assert H % 2 == 0 and W % 2 == 0, "even spatial dims required"
    TH = _pick_tile_h(H, W, Cin, Cout, kh, fuse_pool, N) if tile_h is None else tile_h
    assert H % TH == 0 and TH % 2 == 0
    n_tiles = H // TH
    Wr = _round_up(W, 16)

    if fuse_pool:
        out_shape = jax.ShapeDtypeStruct((N, H // 2, W // 2, Cout), jnp.bfloat16)
        out_spec = pl.BlockSpec((1, TH // 2, W // 2, Cout), lambda n, i: (n, i, 0, 0))
    else:
        out_shape = jax.ShapeDtypeStruct((N, H, W, Cout), jnp.bfloat16)
        out_spec = pl.BlockSpec((1, TH, W, Cout), lambda n, i: (n, i, 0, 0))

    in_specs = [
        pl.BlockSpec((1, TH, W, Cin), lambda n, i: (n, i, 0, 0)),
        # 1-row halo above (clamped at the top; zeroed in-kernel at the border)
        pl.BlockSpec((1, 1, W, Cin),
                     lambda n, i: (n, jnp.maximum(i * TH - 1, 0), 0, 0)),
        # 1-row halo below (clamped at the bottom; zeroed in-kernel at the border)
        pl.BlockSpec((1, 1, W, Cin),
                     lambda n, i: (n, jnp.minimum((i + 1) * TH, H - 1), 0, 0)),
        pl.BlockSpec((kh, 3 * Cin, Cout), lambda n, i: (0, 0, 0)),
        pl.BlockSpec((1, Cout), lambda n, i: (0, 0)),
    ]
    scratch_shapes = [
        pltpu.VMEM((TH + kh - 1, Wr, 3 * Cin), jnp.bfloat16),   # width-im2col tile
        pltpu.VMEM((W, Cout), jnp.float32),                     # pool row scratch
    ]
    kernel = functools.partial(_conv_kernel, kh=kh, fuse_pool=fuse_pool)
    return pl.pallas_call(
        kernel,
        out_shape=out_shape,
        grid_spec=pltpu.PrefetchScalarGridSpec(
            num_scalar_prefetch=0,
            grid=(N, n_tiles),
            in_specs=in_specs,
            out_specs=out_spec,
            scratch_shapes=scratch_shapes),
        compiler_params=pltpu.CompilerParams(
            dimension_semantics=("parallel", "parallel"),
            vmem_limit_bytes=48 * 1024 * 1024),
    )(x, x, x, wk, b)


# ------------------------------- parameters & forward -------------------------------

# (Cin, Cout) of the 8 conv layers in VGG19 features[0:19]
_CONV_CFG = [(3, 64), (64, 64),                                 # slice1
             (64, 128), (128, 128),                             # slice2
             (128, 256), (256, 256), (256, 256), (256, 256)]    # slice3
_POOL_AFTER = (1, 3, 7)   # conv indices followed by the 2x2 maxpool (slice boundaries)


def init_params(key):
    params = []
    for cin, cout in _CONV_CFG:
        key, kw, kb = jax.random.split(key, 3)
        std = (2.0 / (9 * cin)) ** 0.5      # He init (ReLU), deterministic
        w = jax.random.normal(kw, (3, 3, cin, cout), jnp.float32) * std
        b = jax.random.normal(kb, (1, cout), jnp.float32) * 0.01
        params.append((w, b))
    return params


def _preshift_rows(x):
    """(N,H,W,3) -> (N,H,W,9): channel blocks are image rows h-1, h, h+1 (zero-padded),
    so the first conv becomes a 1x3 conv with 9 input channels (single K=27 matmul)."""
    H = x.shape[1]
    xp = jnp.pad(x, ((0, 0), (1, 1), (0, 0), (0, 0)))
    return jnp.concatenate([xp[:, 0:H], xp[:, 1:H + 1], xp[:, 2:H + 2]], axis=-1)


@jax.jit
def perceptual_net(x_nchw, params):
    """Forward of PerceptualNet. x_nchw: (N, 3, H, W). Returns (h1, h2, h3) in NCHW."""
    h = jnp.transpose(x_nchw, (0, 2, 3, 1)).astype(jnp.bfloat16)   # NCHW -> NHWC, bf16
    feats = []
    for idx, (w, b) in enumerate(params):
        cin, cout = w.shape[2], w.shape[3]
        b32 = b.astype(jnp.float32)
        pool = idx in _POOL_AFTER
        if idx == 0:
            # dedicated first-layer path: vertical taps folded into channels -> K = 27
            h = _preshift_rows(h)
            wk = jnp.transpose(w, (1, 0, 2, 3)).reshape(1, 27, cout).astype(jnp.bfloat16)
            h = conv3x3_relu(h, wk, b32, kh=1, fuse_pool=pool)
        else:
            wk = w.reshape(3, 3 * cin, cout).astype(jnp.bfloat16)
            h = conv3x3_relu(h, wk, b32, kh=3, fuse_pool=pool)
        if pool:
            feats.append(h)
    to_nchw = lambda t: jnp.transpose(t, (0, 3, 1, 2)).astype(jnp.float32)
    return tuple(to_nchw(f) for f in feats)


# ------------------------------ pure-JAX reference (checks) ------------------------------

def _conv_ref(x, w, b):
    y = jax.lax.conv_general_dilated(
        x.astype(jnp.bfloat16), w.astype(jnp.bfloat16),
        window_strides=(1, 1), padding=((1, 1), (1, 1)),
        dimension_numbers=("NHWC", "HWIO", "NHWC"),
        preferred_element_type=jnp.float32)
    return jnp.maximum(y + b.reshape(1, 1, 1, -1), 0.0)


def _pool_ref(y):
    N, H, W, C = y.shape
    return y.reshape(N, H // 2, 2, W // 2, 2, C).max(axis=(2, 4))


@jax.jit
def _perceptual_net_ref(x_nchw, params):
    h = jnp.transpose(x_nchw, (0, 2, 3, 1)).astype(jnp.bfloat16)
    feats = []
    for idx, (w, b) in enumerate(params):
        h = _conv_ref(h, w, b)
        if idx in _POOL_AFTER:
            h = _pool_ref(h)
        h = h.astype(jnp.bfloat16)
        if idx in _POOL_AFTER:
            feats.append(h)
    to_nchw = lambda t: jnp.transpose(t, (0, 3, 1, 2)).astype(jnp.float32)
    return tuple(to_nchw(f) for f in feats)


def _max_rel_err(a, b):
    a = jnp.asarray(a, jnp.float32)
    b = jnp.asarray(b, jnp.float32)
    return float(jnp.max(jnp.abs(a - b)) / (jnp.max(jnp.abs(b)) + 1e-6))


if __name__ == "__main__":
    key = jax.random.PRNGKey(0)
    kx, kp, kt = jax.random.split(key, 3)
    x = jax.random.normal(kx, (2, 3, 16, 16), jnp.float32)   # VGG expects 3 input channels
    params = init_params(kp)

    # --- unit check: multi-tile halo path (+ fused pool) vs pure-JAX reference ---
    xt = jax.random.normal(kt, (2, 16, 16, 64), jnp.float32).astype(jnp.bfloat16)
    wt, bt = params[1]
    wt16 = wt.astype(jnp.bfloat16)
    wk1 = wt16.reshape(3, 3 * 64, 64)
    bt32 = bt.astype(jnp.float32)
    ref_c = _conv_ref(xt, wt16, bt)
    got_c = conv3x3_relu(xt, wk1, bt32, kh=3, fuse_pool=False, tile_h=8)  # 2 tiles -> halos
    assert _max_rel_err(got_c, ref_c) < 2e-2, "tiled conv3x3_relu mismatch"
    got_p = conv3x3_relu(xt, wk1, bt32, kh=3, fuse_pool=True, tile_h=8)
    ref_p = _pool_ref(ref_c)
    assert _max_rel_err(got_p, ref_p) < 2e-2, "fused conv+pool mismatch"

    # --- full forward pass ---
    h1, h2, h3 = perceptual_net(x, params)
    jax.block_until_ready((h1, h2, h3))
    assert h1.shape == (2, 64, 8, 8)
    assert h2.shape == (2, 128, 4, 4)
    assert h3.shape == (2, 256, 2, 2)

    # --- end-to-end numeric check vs pure-JAX reference with the same dtype flow ---
    r1, r2, r3 = _perceptual_net_ref(x, params)
    assert _max_rel_err(h1, r1) < 5e-2
    assert _max_rel_err(h2, r2) < 5e-2
    assert _max_rel_err(h3, r3) < 5e-2

    print("KERNEL_OK")
</pallas_src>

<mosaic_0001>
module attributes {stable_mosaic.version = 11 : i64} {
  func.func @_conv_kernel(%arg0: i32, %arg1: i32, %arg2: memref<1x8x16x64xbf16, #tpu.memory_space<vmem>>, %arg3: memref<1x1x16x64xbf16, #tpu.memory_space<vmem>>, %arg4: memref<1x1x16x64xbf16, #tpu.memory_space<vmem>>, %arg5: memref<3x192x64xbf16, #tpu.memory_space<vmem>>, %arg6: memref<1x64xf32, #tpu.memory_space<vmem>>, %arg7: memref<1x8x16x64xbf16, #tpu.memory_space<vmem>>, %arg8: memref<10x16x192xbf16, #tpu.memory_space<vmem>>, %arg9: memref<16x64xf32, #tpu.memory_space<vmem>>) attributes {dimension_semantics = [#tpu.dimension_semantics<parallel>, #tpu.dimension_semantics<parallel>], iteration_bounds = array<i64: 2, 2>, scalar_prefetch = 0 : i64, scratch_operands = 2 : i64, tpu.core_type = #tpu.core_type<tc>, window_params = [{transform_indices = @transform_0, window_bounds = array<i64: 1, 8, 16, 64>}, {transform_indices = @transform_1, window_bounds = array<i64: 1, 1, 16, 64>}, {transform_indices = @transform_2, window_bounds = array<i64: 1, 1, 16, 64>}, {pipeline_mode = #tpu.pipeline_mode<synchronous>, transform_indices = @transform_3, window_bounds = array<i64: 3, 192, 64>}, {pipeline_mode = #tpu.pipeline_mode<synchronous>, transform_indices = @transform_4, window_bounds = array<i64: 1, 64>}, {transform_indices = @transform_5, window_bounds = array<i64: 1, 8, 16, 64>}]} {
    %cst = arith.constant 0.000000e+00 : bf16
    %0 = vector.broadcast %cst : bf16 to vector<10x1x64xbf16>
    %c0 = arith.constant 0 : index
    %c0_0 = arith.constant 0 : index
    %c0_1 = arith.constant 0 : index
    %1 = vector.load %arg8[%c0, %c0_0, %c0_1] : memref<10x16x192xbf16, #tpu.memory_space<vmem>>, vector<10x1x64xbf16>
    tpu.vector_store %arg8[%c0, %c0_0, %c0_1], %0 {strides = array<i32>} : memref<10x16x192xbf16, #tpu.memory_space<vmem>>, vector<10x1x64xbf16>,
    %c0_2 = arith.constant 0 : index
    %c15 = arith.constant 15 : index
    %c128 = arith.constant 128 : index
    %2 = vector.load %arg8[%c0_2, %c15, %c128] : memref<10x16x192xbf16, #tpu.memory_space<vmem>>, vector<10x1x64xbf16>
    tpu.vector_store %arg8[%c0_2, %c15, %c128], %0 {strides = array<i32>} : memref<10x16x192xbf16, #tpu.memory_space<vmem>>, vector<10x1x64xbf16>,
    %c0_3 = arith.constant 0 : index
    %c0_4 = arith.constant 0 : index
    %c0_5 = arith.constant 0 : index
    %c0_6 = arith.constant 0 : index
    %3 = vector.load %arg2[%c0_3, %c0_4, %c0_5, %c0_6] : memref<1x8x16x64xbf16, #tpu.memory_space<vmem>>, vector<1x8x16x64xbf16>
    %4 = vector.shape_cast %3 : vector<1x8x16x64xbf16> to vector<8x16x64xbf16>
    %c1 = arith.constant 1 : index
    %c0_7 = arith.constant 0 : index
    %c64 = arith.constant 64 : index
    %5 = vector.load %arg8[%c1, %c0_7, %c64] : memref<10x16x192xbf16, #tpu.memory_space<vmem>>, vector<8x16x64xbf16>
    tpu.vector_store %arg8[%c1, %c0_7, %c64], %4 {strides = array<i32>} : memref<10x16x192xbf16, #tpu.memory_space<vmem>>, vector<8x16x64xbf16>,
    %6 = vector.extract_strided_slice %4 {offsets = [0, 0, 0], sizes = [8, 15, 64], strides = [1, 1, 1]} : vector<8x16x64xbf16> to vector<8x15x64xbf16>
    %c1_8 = arith.constant 1 : index
    %c1_9 = arith.constant 1 : index
    %c0_10 = arith.constant 0 : index
    %7 = vector.load %arg8[%c1_8, %c1_9, %c0_10] : memref<10x16x192xbf16, #tpu.memory_space<vmem>>, vector<8x15x64xbf16>
    tpu.vector_store %arg8[%c1_8, %c1_9, %c0_10], %6 {strides = array<i32>} : memref<10x16x192xbf16, #tpu.memory_space<vmem>>, vector<8x15x64xbf16>,
    %8 = vector.extract_strided_slice %4 {offsets = [0, 1, 0], sizes = [8, 15, 64], strides = [1, 1, 1]} : vector<8x16x64xbf16> to vector<8x15x64xbf16>
    %c1_11 = arith.constant 1 : index
    %c0_12 = arith.constant 0 : index
    %c128_13 = arith.constant 128 : index
    %9 = vector.load %arg8[%c1_11, %c0_12, %c128_13] : memref<10x16x192xbf16, #tpu.memory_space<vmem>>, vector<8x15x64xbf16>
    tpu.vector_store %arg8[%c1_11, %c0_12, %c128_13], %8 {strides = array<i32>} : memref<10x16x192xbf16, #tpu.memory_space<vmem>>, vector<8x15x64xbf16>,
    %cst_14 = arith.constant 0.000000e+00 : bf16
    %10 = vector.broadcast %cst_14 : bf16 to vector<1x16x192xbf16>
    %c0_i32 = arith.constant 0 : i32
    %11 = arith.cmpi sgt, %arg1, %c0_i32 : i32
    %12 = arith.extui %11 : i1 to i32
    %c0_i32_15 = arith.constant 0 : i32
    %13 = arith.cmpi ne, %12, %c0_i32_15 : i32
    scf.if %13 {
      %c0_26 = arith.constant 0 : index
      %c0_27 = arith.constant 0 : index
      %c0_28 = arith.constant 0 : index
      %c0_29 = arith.constant 0 : index
      %25 = vector.load %arg3[%c0_26, %c0_27, %c0_28, %c0_29] : memref<1x1x16x64xbf16, #tpu.memory_space<vmem>>, vector<1x1x16x64xbf16>
      %26 = vector.shape_cast %25 : vector<1x1x16x64xbf16> to vector<1x16x64xbf16>
      %c0_30 = arith.constant 0 : index
      %c0_31 = arith.constant 0 : index
      %c64_32 = arith.constant 64 : index
      %27 = vector.load %arg8[%c0_30, %c0_31, %c64_32] : memref<10x16x192xbf16, #tpu.memory_space<vmem>>, vector<1x16x64xbf16>
      tpu.vector_store %arg8[%c0_30, %c0_31, %c64_32], %26 {strides = array<i32>} : memref<10x16x192xbf16, #tpu.memory_space<vmem>>, vector<1x16x64xbf16>,
      %28 = vector.extract_strided_slice %26 {offsets = [0, 0, 0], sizes = [1, 15, 64], strides = [1, 1, 1]} : vector<1x16x64xbf16> to vector<1x15x64xbf16>
      %c0_33 = arith.constant 0 : index
      %c1_34 = arith.constant 1 : index
      %c0_35 = arith.constant 0 : index
      %29 = vector.load %arg8[%c0_33, %c1_34, %c0_35] : memref<10x16x192xbf16, #tpu.memory_space<vmem>>, vector<1x15x64xbf16>
      tpu.vector_store %arg8[%c0_33, %c1_34, %c0_35], %28 {strides = array<i32>} : memref<10x16x192xbf16, #tpu.memory_space<vmem>>, vector<1x15x64xbf16>,
      %30 = vector.extract_strided_slice %26 {offsets = [0, 1, 0], sizes = [1, 15, 64], strides = [1, 1, 1]} : vector<1x16x64xbf16> to vector<1x15x64xbf16>
      %c0_36 = arith.constant 0 : index
      %c0_37 = arith.constant 0 : index
      %c128_38 = arith.constant 128 : index
      %31 = vector.load %arg8[%c0_36, %c0_37, %c128_38] : memref<10x16x192xbf16, #tpu.memory_space<vmem>>, vector<1x15x64xbf16>
      tpu.vector_store %arg8[%c0_36, %c0_37, %c128_38], %30 {strides = array<i32>} : memref<10x16x192xbf16, #tpu.memory_space<vmem>>, vector<1x15x64xbf16>,
    } else {
    }
    %c0_i32_16 = arith.constant 0 : i32
    %14 = arith.cmpi eq, %arg1, %c0_i32_16 : i32
    %15 = arith.extui %14 : i1 to i32
    %c0_i32_17 = arith.constant 0 : i32
    %16 = arith.cmpi ne, %15, %c0_i32_17 : i32
    scf.if %16 {
      %c0_26 = arith.constant 0 : index
      %c0_27 = arith.constant 0 : index
      %c0_28 = arith.constant 0 : index
      %25 = vector.load %arg8[%c0_26, %c0_27, %c0_28] : memref<10x16x192xbf16, #tpu.memory_space<vmem>>, vector<1x16x192xbf16>
      tpu.vector_store %arg8[%c0_26, %c0_27, %c0_28], %10 {strides = array<i32>} : memref<10x16x192xbf16, #tpu.memory_space<vmem>>, vector<1x16x192xbf16>,
    } else {
    }
    %c1_i32 = arith.constant 1 : i32
    %17 = arith.cmpi slt, %arg1, %c1_i32 : i32
    %18 = arith.extui %17 : i1 to i32
    %c0_i32_18 = arith.constant 0 : i32
    %19 = arith.cmpi ne, %18, %c0_i32_18 : i32
    scf.if %19 {
      %c0_26 = arith.constant 0 : index
      %c0_27 = arith.constant 0 : index
      %c0_28 = arith.constant 0 : index
      %c0_29 = arith.constant 0 : index
      %25 = vector.load %arg4[%c0_26, %c0_27, %c0_28, %c0_29] : memref<1x1x16x64xbf16, #tpu.memory_space<vmem>>, vector<1x1x16x64xbf16>
      %26 = vector.shape_cast %25 : vector<1x1x16x64xbf16> to vector<1x16x64xbf16>
      %c9 = arith.constant 9 : index
      %c0_30 = arith.constant 0 : index
      %c64_31 = arith.constant 64 : index
      %27 = vector.load %arg8[%c9, %c0_30, %c64_31] : memref<10x16x192xbf16, #tpu.memory_space<vmem>>, vector<1x16x64xbf16>
      tpu.vector_store %arg8[%c9, %c0_30, %c64_31], %26 {strides = array<i32>} : memref<10x16x192xbf16, #tpu.memory_space<vmem>>, vector<1x16x64xbf16>,
      %28 = vector.extract_strided_slice %26 {offsets = [0, 0, 0], sizes = [1, 15, 64], strides = [1, 1, 1]} : vector<1x16x64xbf16> to vector<1x15x64xbf16>
      %c9_32 = arith.constant 9 : index
      %c1_33 = arith.constant 1 : index
      %c0_34 = arith.constant 0 : index
      %29 = vector.load %arg8[%c9_32, %c1_33, %c0_34] : memref<10x16x192xbf16, #tpu.memory_space<vmem>>, vector<1x15x64xbf16>
      tpu.vector_store %arg8[%c9_32, %c1_33, %c0_34], %28 {strides = array<i32>} : memref<10x16x192xbf16, #tpu.memory_space<vmem>>, vector<1x15x64xbf16>,
      %30 = vector.extract_strided_slice %26 {offsets = [0, 1, 0], sizes = [1, 15, 64], strides = [1, 1, 1]} : vector<1x16x64xbf16> to vector<1x15x64xbf16>
      %c9_35 = arith.constant 9 : index
      %c0_36 = arith.constant 0 : index
      %c128_37 = arith.constant 128 : index
      %31 = vector.load %arg8[%c9_35, %c0_36, %c128_37] : memref<10x16x192xbf16, #tpu.memory_space<vmem>>, vector<1x15x64xbf16>
      tpu.vector_store %arg8[%c9_35, %c0_36, %c128_37], %30 {strides = array<i32>} : memref<10x16x192xbf16, #tpu.memory_space<vmem>>, vector<1x15x64xbf16>,
    } else {
    }
    %c1_i32_19 = arith.constant 1 : i32
    %20 = arith.cmpi eq, %arg1, %c1_i32_19 : i32
    %21 = arith.extui %20 : i1 to i32
    %c0_i32_20 = arith.constant 0 : i32
    %22 = arith.cmpi ne, %21, %c0_i32_20 : i32
    scf.if %22 {
      %c9 = arith.constant 9 : index
      %c0_26 = arith.constant 0 : index
      %c0_27 = arith.constant 0 : index
      %25 = vector.load %arg8[%c9, %c0_26, %c0_27] : memref<10x16x192xbf16, #tpu.memory_space<vmem>>, vector<1x16x192xbf16>
      tpu.vector_store %arg8[%c9, %c0_26, %c0_27], %10 {strides = array<i32>} : memref<10x16x192xbf16, #tpu.memory_space<vmem>>, vector<1x16x192xbf16>,
    } else {
    }
    %c0_21 = arith.constant 0 : index
    %c0_22 = arith.constant 0 : index
    %23 = vector.load %arg6[%c0_21, %c0_22] : memref<1x64xf32, #tpu.memory_space<vmem>>, vector<1x64xf32>
    %c0_i32_23 = arith.constant 0 : i32
    %c4_i32 = arith.constant 4 : i32
    %24 = arith.addi %c0_i32_23, %c4_i32 : i32
    %c1_i32_24 = arith.constant 1 : i32
    scf.for %arg10 = %c0_i32_23 to %24 step %c1_i32_24  : i32 {
      %c1_i32_26 = arith.constant 1 : i32
      %25 = arith.muli %arg10, %c1_i32_26 : i32
      %c0_i32_27 = arith.constant 0 : i32
      %26 = arith.addi %c0_i32_27, %25 : i32
      %c2_i32 = arith.constant 2 : i32
      %27 = arith.muli %26, %c2_i32 : i32
      %cst_28 = arith.constant 0.000000e+00 : f32
      %28 = vector.broadcast %cst_28 : f32 to vector<32x64xf32>
      %c0_i32_29 = arith.constant 0 : i32
      %29 = arith.addi %27, %c0_i32_29 : i32
      %30 = arith.index_cast %29 : i32 to index
      %c0_30 = arith.constant 0 : index
      %c0_31 = arith.constant 0 : index
      %31 = vector.load %arg8[%30, %c0_30, %c0_31] : memref<10x16x192xbf16, #tpu.memory_space<vmem>>, vector<2x16x192xbf16>
      %32 = vector.shape_cast %31 : vector<2x16x192xbf16> to vector<32x192xbf16>
      %c0_32 = arith.constant 0 : index
      %c0_33 = arith.constant 0 : index
      %c0_34 = arith.constant 0 : index
      %33 = vector.load %arg5[%c0_32, %c0_33, %c0_34] : memref<3x192x64xbf16, #tpu.memory_space<vmem>>, vector<1x192x64xbf16>
      %34 = vector.shape_cast %33 : vector<1x192x64xbf16> to vector<192x64xbf16>
      %cst_35 = arith.constant dense<0.000000e+00> : vector<32x64xf32>
      %35 = tpu.matmul %32, %34, %cst_35 {dimension_numbers = #tpu.dot_dimension_numbers<[1], [0], [0], [1], [0, 0, 1, 1], [], []>} : vector<32x192xbf16>, vector<192x64xbf16>, vector<32x64xf32> -> vector<32x64xf32>
      %36 = arith.addf %28, %35 : vector<32x64xf32>
      %c1_i32_36 = arith.constant 1 : i32
      %37 = arith.addi %27, %c1_i32_36 : i32
      %38 = arith.index_cast %37 : i32 to index
      %c0_37 = arith.constant 0 : index
      %c0_38 = arith.constant 0 : index
      %39 = vector.load %arg8[%38, %c0_37, %c0_38] : memref<10x16x192xbf16, #tpu.memory_space<vmem>>, vector<2x16x192xbf16>
      %40 = vector.shape_cast %39 : vector<2x16x192xbf16> to vector<32x192xbf16>
      %c1_39 = arith.constant 1 : index
      %c0_40 = arith.constant 0 : index
      %c0_41 = arith.constant 0 : index
      %41 = vector.load %arg5[%c1_39, %c0_40, %c0_41] : memref<3x192x64xbf16, #tpu.memory_space<vmem>>, vector<1x192x64xbf16>
      %42 = vector.shape_cast %41 : vector<1x192x64xbf16> to vector<192x64xbf16>
      %cst_42 = arith.constant dense<0.000000e+00> : vector<32x64xf32>
      %43 = tpu.matmul %40, %42, %cst_42 {dimension_numbers = #tpu.dot_dimension_numbers<[1], [0], [0], [1], [0, 0, 1, 1], [], []>} : vector<32x192xbf16>, vector<192x64xbf16>, vector<32x64xf32> -> vector<32x64xf32>
      %44 = arith.addf %36, %43 : vector<32x64xf32>
      %c2_i32_43 = arith.constant 2 : i32
      %45 = arith.addi %27, %c2_i32_43 : i32
      %46 = arith.index_cast %45 : i32 to index
      %c0_44 = arith.constant 0 : index
      %c0_45 = arith.constant 0 : index
      %47 = vector.load %arg8[%46, %c0_44, %c0_45] : memref<10x16x192xbf16, #tpu.memory_space<vmem>>, vector<2x16x192xbf16>
      %48 = vector.shape_cast %47 : vector<2x16x192xbf16> to vector<32x192xbf16>
      %c2 = arith.constant 2 : index
      %c0_46 = arith.constant 0 : index
      %c0_47 = arith.constant 0 : index
      %49 = vector.load %arg5[%c2, %c0_46, %c0_47] : memref<3x192x64xbf16, #tpu.memory_space<vmem>>, vector<1x192x64xbf16>
      %50 = vector.shape_cast %49 : vector<1x192x64xbf16> to vector<192x64xbf16>
      %cst_48 = arith.constant dense<0.000000e+00> : vector<32x64xf32>
      %51 = tpu.matmul %48, %50, %cst_48 {dimension_numbers = #tpu.dot_dimension_numbers<[1], [0], [0], [1], [0, 0, 1, 1], [], []>} : vector<32x192xbf16>, vector<192x64xbf16>, vector<32x64xf32> -> vector<32x64xf32>
      %52 = arith.addf %44, %51 : vector<32x64xf32>
      %53 = vector.shape_cast %52 : vector<32x64xf32> to vector<2x16x64xf32>
      %54 = vector.shape_cast %23 : vector<1x64xf32> to vector<1x1x64xf32>
      %55 = vector.broadcast %54 : vector<1x1x64xf32> to vector<2x16x64xf32>
      %56 = arith.addf %53, %55 : vector<2x16x64xf32>
      %cst_49 = arith.constant 0.000000e+00 : f32
      %57 = vector.broadcast %cst_49 : f32 to vector<2x16x64xf32>
      %58 = arith.maximumf %56, %57 : vector<2x16x64xf32>
      %59 = arith.truncf %58 : vector<2x16x64xf32> to vector<2x16x64xbf16>
      %c0_50 = arith.constant 0 : index
      %60 = arith.index_cast %27 : i32 to index
      %c0_51 = arith.constant 0 : index
      %c0_52 = arith.constant 0 : index
      %61 = vector.load %arg7[%c0_50, %60, %c0_51, %c0_52] : memref<1x8x16x64xbf16, #tpu.memory_space<vmem>>, vector<1x2x16x64xbf16>
      %62 = vector.shape_cast %61 : vector<1x2x16x64xbf16> to vector<2x16x64xbf16>
      %63 = vector.shape_cast %59 : vector<2x16x64xbf16> to vector<1x2x16x64xbf16>
      tpu.vector_store %arg7[%c0_50, %60, %c0_51, %c0_52], %63 {strides = array<i32>} : memref<1x8x16x64xbf16, #tpu.memory_space<vmem>>, vector<1x2x16x64xbf16>,
    }
    %c4_i32_25 = arith.constant 4 : i32
    return
  }
  func.func @transform_0(%arg0: i32, %arg1: i32) -> (i32, i32, i32, i32) {
    %c0_i32 = arith.constant 0 : i32
    %c0_i32_0 = arith.constant 0 : i32
    %c0_i32_1 = arith.constant 0 : i32
    return %arg0, %arg1, %c0_i32, %c0_i32_0 : i32, i32, i32, i32
  }
  func.func @transform_1(%arg0: i32, %arg1: i32) -> (i32, i32, i32, i32) {
    %c8_i32 = arith.constant 8 : i32
    %0 = arith.muli %arg1, %c8_i32 : i32
    %c1_i32 = arith.constant 1 : i32
    %1 = arith.subi %0, %c1_i32 : i32
    %c0_i32 = arith.constant 0 : i32
    %2 = arith.maxsi %1, %c0_i32 : i32
    %c0_i32_0 = arith.constant 0 : i32
    %c0_i32_1 = arith.constant 0 : i32
    %c0_i32_2 = arith.constant 0 : i32
    return %arg0, %2, %c0_i32_0, %c0_i32_1 : i32, i32, i32, i32
  }
  func.func @transform_2(%arg0: i32, %arg1: i32) -> (i32, i32, i32, i32) {
    %c1_i32 = arith.constant 1 : i32
    %0 = arith.addi %arg1, %c1_i32 : i32
    %c8_i32 = arith.constant 8 : i32
    %1 = arith.muli %0, %c8_i32 : i32
    %c15_i32 = arith.constant 15 : i32
    %2 = arith.minsi %1, %c15_i32 : i32
    %c0_i32 = arith.constant 0 : i32
    %c0_i32_0 = arith.constant 0 : i32
    %c0_i32_1 = arith.constant 0 : i32
    return %arg0, %2, %c0_i32, %c0_i32_0 : i32, i32, i32, i32
  }
  func.func @transform_3(%arg0: i32, %arg1: i32) -> (i32, i32, i32) {
    %c0_i32 = arith.constant 0 : i32
    %c0_i32_0 = arith.constant 0 : i32
    %c0_i32_1 = arith.constant 0 : i32
    %c0_i32_2 = arith.constant 0 : i32
    return %c0_i32, %c0_i32_0, %c0_i32_1 : i32, i32, i32
  }
  func.func @transform_4(%arg0: i32, %arg1: i32) -> (i32, i32) {
    %c0_i32 = arith.constant 0 : i32
    %c0_i32_0 = arith.constant 0 : i32
    %c0_i32_1 = arith.constant 0 : i32
    return %c0_i32, %c0_i32_0 : i32, i32
  }
  func.func @transform_5(%arg0: i32, %arg1: i32) -> (i32, i32, i32, i32) {
    %c0_i32 = arith.constant 0 : i32
    %c0_i32_0 = arith.constant 0 : i32
    %c0_i32_1 = arith.constant 0 : i32
    return %arg0, %arg1, %c0_i32, %c0_i32_0 : i32, i32, i32, i32
  }
}

</mosaic_0001>

<llo_original>
// kernel: tpu_custom_call.1
$region0: #{tpu_custom_call.1}
  #allocation0 [shape = 'u32[]', space=smem, size = 0x4, offset = 0x4, fixed_abs, tag = 'smem constant byte address 0x4 - core index']
  #allocation1 [shape = 'u32[72,128]{1,0:T(1,128)}', space=vmem, size = 0x9000, scoped, tag = 'internal scratch']
  #allocation2 [shape = 'bf16[10,16,192]{2,1,0:T(8,128)(2,1)}', space=vmem, size = 0x14000, scoped, tag = 'scratch operand']
  #allocation3 [shape = 'f32[16,64]{1,0:T(8,128)}', space=vmem, size = 0x2000, scoped, tag = 'scratch operand']
  %s0 = inlined_call_operand.vmem [shape: bf16[2,16,16,64], index: 0, kind: input, shape index: {}]
  %s1 = inlined_call_operand.hbm [shape: bf16[2,16,16,64], index: 1, kind: input, shape index: {}]
  %s2 = inlined_call_operand.hbm [shape: bf16[2,16,16,64], index: 2, kind: input, shape index: {}]
  %s3 = inlined_call_operand.vmem [shape: bf16[3,192,64], index: 3, kind: input, shape index: {}]
  %s4 = inlined_call_operand.vmem [shape: f32[1,64], index: 4, kind: input, shape index: {}]
  %s5 = inlined_call_operand.hbm [shape: bf16[2,16,16,64], index: 5, kind: output, shape index: {}]
  %s6 = sld [smem:[#allocation0]]
  $region84: #{tpu_custom_call.1} parent=0
    _
  %s8 = ssub.s32 1, %s6
  %s9 = scalar_select 0, %s8, %s6
  $region1: #{tpu_custom_call.1} parent=0
    #allocation4 [shape = 'u8[8192]{0}', space=vmem, size = 0x2000, scoped, tag = 'input window, operand 1']
    #allocation5 [shape = 's32[2]{0}', space=sflag, size = 0x8, scoped, tag = 'scoped memory for tpu_custom_call.1']
    #allocation6 [shape = 's32[2]{0}', space=sflag, size = 0x8, scoped, tag = 'scoped memory for tpu_custom_call.1']
    #allocation7 [shape = 'u8[8192]{0}', space=vmem, size = 0x2000, scoped, tag = 'input window, operand 2']
    #allocation8 [shape = 's32[2]{0}', space=sflag, size = 0x8, scoped, tag = 'scoped memory for tpu_custom_call.1']
    #allocation9 [shape = 'u8[65536]{0}', space=vmem, size = 0x10000, scoped, tag = 'output window, operand 0']
    %10 = vsyncpa [#allocation5], 0
    %s11 = scalar_lea.sflag [#allocation5], 1
    %12 = vsyncpa %s11, 0
    %13 = vsyncpa [#allocation8], 0
    %s14 = scalar_lea.sflag [#allocation8], 1
    %15 = vsyncpa %s14, 0
    %16 = vsyncpa [#allocation6], 0
    %s17 = scalar_lea.sflag [#allocation6], 1
    %18 = vsyncpa %s17, 0
    loop: start=0, step=1, limit=6
    $region2: #{tpu_custom_call.1} parent=1 // loop_pre_header
      _
    $region3: #{tpu_custom_call.1} parent=1 // loop_header
      %s20 = sphi 0, %s24
      %p21 = scmp.ge.s32.totalorder %s20, 6
      %s27 = sphi 0, %s39
      %s28 = sphi 0, %s35
      %s29 = sphi 0, %s27
      %s30 = sphi 0, %s28
      %s31 = sphi 0, %s29
      %s32 = sphi 0, %s30
      %s44 = sphi 0, %s46
      %s47 = sphi 0, %s44
      %s48 = sphi 0, %s47
      %s64 = sphi 0, %s48
      %s80 = sphi 0, %s82
      %s83 = sphi 0, %s80
      %s84 = sphi 0, %s83
      %s100 = sphi 0, %s84
      %s116 = sphi 0, %s118
      %s119 = sphi 0, %s116
      %s120 = sphi 0, %s119
      %s136 = sphi 0, %s120
      %s140 = sphi 0, %s140
      %s142 = sphi 0, %s140
      %s143 = sphi 0, %s142
      %s157 = sphi 0, %s143
      %s161 = sphi 0, %s161
      %s163 = sphi 0, %s161
      %s164 = sphi 0, %s163
      %s178 = sphi 0, %s164
      %s186 = sphi 0, %s188
      %s189 = sphi 0, %s186
      %s190 = sphi 0, %s189
      %s206 = sphi 0, %s190
    $region4: #{tpu_custom_call.1} parent=1 // loop_header_branch
      %23 = sbr.rel (%p21) target = $region8
    $region5: #{tpu_custom_call.1} parent=1 // loop_body
      %s25 = ssub.s32 %s20, 1
      %s26 = ssub.s32 %s20, 2
      %s33 = sadd.s32 1, %s28
      %p34 = scmp.ge.s32.totalorder %s33, 2
      %s35 = scalar_select %p34, 0, %s33
      %s36 = sadd.s32 1, %s27
      %s37 = scalar_select %p34, %s36, %s27
      %p38 = scmp.ge.s32.totalorder %s37, 2
      %s39 = scalar_select %p38, 0, %s37
      %s40 = ssub.s32 %s27, %s39
      %s41 = ssub.s32 %s28, %s35
      %s42 = sor.u32 %s40, %s41
      %p43 = scmp.eq.s32.totalorder %s42, 0
      %s45 = sadd.s32 %s44, 1
      %s46 = scalar_select %p43, %s44, %s45
      %p49 = pneg %p43
      %p50 = scmp.eq.s32.totalorder %s20, 3
      %p51 = por %p49, %p50
      %p52 = scmp.ne.s32.totalorder %s44, %s47
      %p53 = scmp.eq.s32.totalorder %s20, 0
      %p54 = por %p52, %p53
      %p55 = scmp.ne.s32.totalorder %s44, %s47
      %p56 = scmp.eq.s32.totalorder %s25, 3
      %p57 = por %p55, %p56
      %p58 = scmp.ne.s32.totalorder %s47, %s48
      %p59 = scmp.eq.s32.totalorder %s25, 0
      %p60 = por %p58, %p59
      %p61 = scmp.ne.s32.totalorder %s47, %s48
      %p62 = scmp.eq.s32.totalorder %s26, 3
      %p63 = por %p61, %p62
      %p65 = scmp.ne.s32.totalorder %s48, %s64
      %p66 = scmp.eq.s32.totalorder %s26, 0
      %p67 = por %p65, %p66
      %s68 = smul.u32 %s28, 8
      %s69 = ssub.s32 %s68, 1
      %p70 = scmp.gt.s32.totalorder %s69, 0
      %s71 = scalar_select %p70, %s69, 0
      %s72 = smul.u32 %s35, 8
      %s73 = ssub.s32 %s72, 1
      %p74 = scmp.gt.s32.totalorder %s73, 0
      %s75 = scalar_select %p74, %s73, 0
      %s76 = ssub.s32 %s27, %s39
      %s77 = ssub.s32 %s71, %s75
      %s78 = sor.u32 %s76, %s77
      %p79 = scmp.eq.s32.totalorder %s78, 0
      %s81 = sadd.s32 %s80, 1
      %s82 = scalar_select %p79, %s80, %s81
      %p85 = pneg %p79
      %p86 = scmp.eq.s32.totalorder %s20, 3
      %p87 = por %p85, %p86
      %p88 = scmp.ne.s32.totalorder %s80, %s83
      %p89 = scmp.eq.s32.totalorder %s20, 0
      %p90 = por %p88, %p89
      %p91 = scmp.ne.s32.totalorder %s80, %s83
      %p92 = scmp.eq.s32.totalorder %s25, 3
      %p93 = por %p91, %p92
      %p94 = scmp.ne.s32.totalorder %s83, %s84
      %p95 = scmp.eq.s32.totalorder %s25, 0
      %p96 = por %p94, %p95
      %p97 = scmp.ne.s32.totalorder %s83, %s84
      %p98 = scmp.eq.s32.totalorder %s26, 3
      %p99 = por %p97, %p98
      %p101 = scmp.ne.s32.totalorder %s84, %s100
      %p102 = scmp.eq.s32.totalorder %s26, 0
      %p103 = por %p101, %p102
      %s104 = sadd.s32 %s28, 1
      %s105 = smul.u32 %s104, 8
      %p106 = scmp.lt.s32.totalorder %s105, 15
      %s107 = scalar_select %p106, %s105, 15
      %s108 = sadd.s32 %s35, 1
      %s109 = smul.u32 %s108, 8
      %p110 = scmp.lt.s32.totalorder %s109, 15
      %s111 = scalar_select %p110, %s109, 15
      %s112 = ssub.s32 %s27, %s39
      %s113 = ssub.s32 %s107, %s111
      %s114 = sor.u32 %s112, %s113
      %p115 = scmp.eq.s32.totalorder %s114, 0
      %s117 = sadd.s32 %s116, 1
      %s118 = scalar_select %p115, %s116, %s117
      %p121 = pneg %p115
      %p122 = scmp.eq.s32.totalorder %s20, 3
      %p123 = por %p121, %p122
      %p124 = scmp.ne.s32.totalorder %s116, %s119
      %p125 = scmp.eq.s32.totalorder %s20, 0
      %p126 = por %p124, %p125
      %p127 = scmp.ne.s32.totalorder %s116, %s119
      %p128 = scmp.eq.s32.totalorder %s25, 3
      %p129 = por %p127, %p128
      %p130 = scmp.ne.s32.totalorder %s119, %s120
      %p131 = scmp.eq.s32.totalorder %s25, 0
      %p132 = por %p130, %p131
      %p133 = scmp.ne.s32.totalorder %s119, %s120
      %p134 = scmp.eq.s32.totalorder %s26, 3
      %p135 = por %p133, %p134
      %p137 = scmp.ne.s32.totalorder %s120, %s136
      %p138 = scmp.eq.s32.totalorder %s26, 0
      %p139 = por %p137, %p138
      %s141 = sadd.s32 %s140, 1
      %p144 = scmp.eq.s32.totalorder %s20, 3
      %p145 = scmp.ne.s32.totalorder %s140, %s142
      %p146 = scmp.eq.s32.totalorder %s20, 0
      %p147 = por %p145, %p146
      %p148 = scmp.ne.s32.totalorder %s140, %s142
      %p149 = scmp.eq.s32.totalorder %s25, 3
      %p150 = por %p148, %p149
      %p151 = scmp.ne.s32.totalorder %s142, %s143
      %p152 = scmp.eq.s32.totalorder %s25, 0
      %p153 = por %p151, %p152
      %p154 = scmp.ne.s32.totalorder %s142, %s143
      %p155 = scmp.eq.s32.totalorder %s26, 3
      %p156 = por %p154, %p155
      %p158 = scmp.ne.s32.totalorder %s143, %s157
      %p159 = scmp.eq.s32.totalorder %s26, 0
      %p160 = por %p158, %p159
      %s162 = sadd.s32 %s161, 1
      %p165 = scmp.eq.s32.totalorder %s20, 3
      %p166 = scmp.ne.s32.totalorder %s161, %s163
      %p167 = scmp.eq.s32.totalorder %s20, 0
      %p168 = por %p166, %p167
      %p169 = scmp.ne.s32.totalorder %s161, %s163
      %p170 = scmp.eq.s32.totalorder %s25, 3
      %p171 = por %p169, %p170
      %p172 = scmp.ne.s32.totalorder %s163, %s164
      %p173 = scmp.eq.s32.totalorder %s25, 0
      %p174 = por %p172, %p173
      %p175 = scmp.ne.s32.totalorder %s163, %s164
      %p176 = scmp.eq.s32.totalorder %s26, 3
      %p177 = por %p175, %p176
      %p179 = scmp.ne.s32.totalorder %s164, %s178
      %p180 = scmp.eq.s32.totalorder %s26, 0
      %p181 = por %p179, %p180
      %s182 = ssub.s32 %s27, %s39
      %s183 = ssub.s32 %s28, %s35
      %s184 = sor.u32 %s182, %s183
      %p185 = scmp.eq.s32.totalorder %s184, 0
      %s187 = sadd.s32 %s186, 1
      %s188 = scalar_select %p185, %s186, %s187
      %p191 = pneg %p185
      %p192 = scmp.eq.s32.totalorder %s20, 3
      %p193 = por %p191, %p192
      %p194 = scmp.ne.s32.totalorder %s186, %s189
      %p195 = scmp.eq.s32.totalorder %s20, 0
      %p196 = por %p194, %p195
      %p197 = scmp.ne.s32.totalorder %s186, %s189
      %p198 = scmp.eq.s32.totalorder %s25, 3
      %p199 = por %p197, %p198
      %p200 = scmp.ne.s32.totalorder %s189, %s190
      %p201 = scmp.eq.s32.totalorder %s25, 0
      %p202 = por %p200, %p201
      %p203 = scmp.ne.s32.totalorder %s189, %s190
      %p204 = scmp.eq.s32.totalorder %s26, 3
      %p205 = por %p203, %p204
      %p207 = scmp.ne.s32.totalorder %s190, %s206
      %p208 = scmp.eq.s32.totalorder %s26, 0
      %p209 = por %p207, %p208
      %p210 = scmp.le.s32.totalorder 1, %s20
      %p211 = scmp.lt.s32.totalorder %s20, 5
      %p212 = pnand %p210, %p211
      %p213 = pneg %p212
      // Predicated region
      $region9: #{tpu_custom_call.1} parent=5 // pred_check
        _
      $region10: #{tpu_custom_call.1} parent=5 // pred_check_branch
        %215 = sbr.rel (%p212) target = $region12
      $region11: #{tpu_custom_call.1} parent=5 // pred_region
        %s216 = ssub.s32 %s20, 1
        // Predicated region
        $region13: #{tpu_custom_call.1} parent=11 // pred_check
          %p217 = pneg %p153
        $region14: #{tpu_custom_call.1} parent=11 // pred_check_branch
          %219 = sbr.rel (%p217) target = $region16
        $region15: #{tpu_custom_call.1} parent=11 // pred_region
          _
        $region16: #{tpu_custom_call.1} parent=11 // pred_fallthru
          _
        // Predicated region
        $region17: #{tpu_custom_call.1} parent=11 // pred_check
          %p220 = pneg %p174
        $region18: #{tpu_custom_call.1} parent=11 // pred_check_branch
          %222 = sbr.rel (%p220) target = $region20
        $region19: #{tpu_custom_call.1} parent=11 // pred_region
          _
        $region20: #{tpu_custom_call.1} parent=11 // pred_fallthru
          _
      $region12: #{tpu_custom_call.1} parent=5 // pred_fallthru
        _
      %p223 = scmp.lt.s32.totalorder %s20, 4
      // Predicated region
      $region21: #{tpu_custom_call.1} parent=5 // pred_check
        %p224 = pneg %p223
      $region22: #{tpu_custom_call.1} parent=5 // pred_check_branch
        %226 = sbr.rel (%p224) target = $region24
      $region23: #{tpu_custom_call.1} parent=5 // pred_region
        // Predicated region
        $region25: #{tpu_custom_call.1} parent=23 // pred_check
          %p227 = pneg %p54
        $region26: #{tpu_custom_call.1} parent=23 // pred_check_branch
          %229 = sbr.rel (%p227) target = $region28
        $region27: #{tpu_custom_call.1} parent=23 // pred_region
          %s230 = smul.u32 8, %s28
          %p231 = scmp.lt.s32.totalorder %s27, 1
          %s232 = scalar_select %p231, %s27, 1
          %p233 = scmp.lt.s32.totalorder %s230, 15
          %s234 = scalar_select %p233, %s230, 15
          %s235 = smul.addr %s234, 2
          %s236 = smul.addr %s232, 32
          %s237 = sadd.s32 %s235, %s236
          %s238 = smul.addr %s237, 4
          %s239 = scalar_lea.vmem %s0, %s238
          %s240 = smul.u32 8, %s28
        $region28: #{tpu_custom_call.1} parent=23 // pred_fallthru
          _
        // Predicated region
        $region29: #{tpu_custom_call.1} parent=23 // pred_check
          %p241 = pneg %p90
        $region30: #{tpu_custom_call.1} parent=23 // pred_check_branch
          %243 = sbr.rel (%p241) target = $region32
        $region31: #{tpu_custom_call.1} parent=23 // pred_region
          %s244 = sand.u32 %s80, 1
          %s245 = scalar_lea.sflag [#allocation5], %s244
          %s246 = sand.u32 %s80, 1
          %s247 = smul.addr %s246, 8
          %s248 = scalar_lea.vmem [#allocation4], %s247
          %s249 = smul.u32 %s28, 8
          %s250 = ssub.s32 %s249, 1
          %p251 = scmp.gt.s32.totalorder %s250, 0
          %s252 = scalar_select %p251, %s250, 0
          %254 = vsyncadd %s245, 0
          %s255 = smul.addr %s252, 2
          %s256 = smul.addr %s27, 32
          %s257 = sadd.s32 %s255, %s256
          %s258 = smul.addr %s257, 4
          %s259 = scalar_lea.hbm %s1, %s258
          %s260 = sshll.u32 %s259, 4
          %s261 = int_to_ptr.hbm [resolvable:$true] %s260
          %s262 = sshll.u32 %s248, 4
          %s263 = int_to_ptr.vmem [resolvable:$true] %s262
          %268 = dma.hbm_to_vmem [thread:$0]  %s261, 128, %s263, %s245, 64, 64, 4
        $region32: #{tpu_custom_call.1} parent=23 // pred_fallthru
          _
        // Predicated region
        $region33: #{tpu_custom_call.1} parent=23 // pred_check
          %p269 = pneg %p126
        $region34: #{tpu_custom_call.1} parent=23 // pred_check_branch
          %271 = sbr.rel (%p269) target = $region36
        $region35: #{tpu_custom_call.1} parent=23 // pred_region
          %s272 = sand.u32 %s116, 1
          %s273 = scalar_lea.sflag [#allocation8], %s272
          %s274 = sand.u32 %s116, 1
          %s275 = smul.addr %s274, 8
          %s276 = scalar_lea.vmem [#allocation7], %s275
          %s277 = sadd.s32 %s28, 1
          %s278 = smul.u32 %s277, 8
          %p279 = scmp.lt.s32.totalorder %s278, 15
          %s280 = scalar_select %p279, %s278, 15
          %282 = vsyncadd %s273, 0
          %s283 = smul.addr %s280, 2
          %s284 = smul.addr %s27, 32
          %s285 = sadd.s32 %s283, %s284
          %s286 = smul.addr %s285, 4
          %s287 = scalar_lea.hbm %s2, %s286
          %s288 = sshll.u32 %s287, 4
          %s289 = int_to_ptr.hbm [resolvable:$true] %s288
          %s290 = sshll.u32 %s276, 4
          %s291 = int_to_ptr.vmem [resolvable:$true] %s290
          %296 = dma.hbm_to_vmem [thread:$0]  %s289, 128, %s291, %s273, 64, 64, 4
        $region36: #{tpu_custom_call.1} parent=23 // pred_fallthru
          _
      $region24: #{tpu_custom_call.1} parent=5 // pred_fallthru
        _
      %p297 = scmp.le.s32.totalorder 1, %s20
      %p298 = scmp.lt.s32.totalorder %s20, 5
      %p299 = pnand %p297, %p298
      %p300 = pneg %p299
      // Predicated region
      $region37: #{tpu_custom_call.1} parent=5 // pred_check
        _
      $region38: #{tpu_custom_call.1} parent=5 // pred_check_branch
        %302 = sbr.rel (%p299) target = $region40
      $region39: #{tpu_custom_call.1} parent=5 // pred_region
        %s303 = ssub.s32 %s20, 1
        %s304 = sand.u32 %s83, 1
        %s305 = scalar_lea.sflag [#allocation5], %s304
        %s306 = sand.u32 %s83, 1
        %s307 = smul.addr %s306, 8
        %s308 = scalar_lea.vmem [#allocation4], %s307
        // Predicated region
        $region41: #{tpu_custom_call.1} parent=39 // pred_check
          %p309 = pneg %p96
        $region42: #{tpu_custom_call.1} parent=39 // pred_check_branch
          %311 = sbr.rel (%p309) target = $region44
        $region43: #{tpu_custom_call.1} parent=39 // pred_region
          %313 = dma.done %s305, 128
        $region44: #{tpu_custom_call.1} parent=39 // pred_fallthru
          _
        %s314 = sand.u32 %s119, 1
        %s315 = scalar_lea.sflag [#allocation8], %s314
        %s316 = sand.u32 %s119, 1
        %s317 = smul.addr %s316, 8
        %s318 = scalar_lea.vmem [#allocation7], %s317
        // Predicated region
        $region45: #{tpu_custom_call.1} parent=39 // pred_check
          %p319 = pneg %p132
        $region46: #{tpu_custom_call.1} parent=39 // pred_check_branch
          %321 = sbr.rel (%p319) target = $region48
        $region47: #{tpu_custom_call.1} parent=39 // pred_region
          %323 = dma.done %s315, 128
        $region48: #{tpu_custom_call.1} parent=39 // pred_fallthru
          _
        %s324 = smul.u32 8, %s30
        %p325 = scmp.lt.s32.totalorder %s29, 1
        %s326 = scalar_select %p325, %s29, 1
        %p327 = scmp.lt.s32.totalorder %s324, 15
        %s328 = scalar_select %p327, %s324, 15
        %s329 = smul.addr %s328, 2
        %s330 = smul.addr %s326, 32
        %s331 = sadd.s32 %s329, %s330
        %s332 = smul.addr %s331, 4
        %s333 = scalar_lea.vmem %s0, %s332
        %p334 = pneg %p60
        %p335 = pneg %p57
        %s336 = sand.u32 %s83, 1
        %s337 = scalar_lea.sflag [#allocation5], %s336
        %s338 = sand.u32 %s83, 1
        %s339 = smul.addr %s338, 8
        %s340 = scalar_lea.vmem [#allocation4], %s339
        %p341 = pneg %p96
        %p342 = pneg %p93
        %s343 = sand.u32 %s119, 1
        %s344 = scalar_lea.sflag [#allocation8], %s343
        %s345 = sand.u32 %s119, 1
        %s346 = smul.addr %s345, 8
        %s347 = scalar_lea.vmem [#allocation7], %s346
        %p348 = pneg %p132
        %p349 = pneg %p129
        %p350 = pneg %p153
        %p351 = pneg %p150
        %p352 = pneg %p174
        %p353 = pneg %p171
        %p354 = pneg %p202
        %p355 = pneg %p199
        %s356 = sand.u32 %s189, 1
        %s357 = scalar_lea.sflag [#allocation6], %s356
        %s358 = sand.u32 %s189, 1
        %s359 = smul.addr %s358, 64
        %s360 = scalar_lea.vmem [#allocation9], %s359
        %s361 = smul.u32 8, %s30
        %p362 = scmp.lt.s32.totalorder %s29, 1
        %s363 = scalar_select %p362, %s29, 1
        %p364 = scmp.lt.s32.totalorder %s361, 15
        %s365 = scalar_select %p364, %s361, 15
        %s366 = smul.addr %s365, 2
        %s367 = smul.addr %s363, 32
        %s368 = sadd.s32 %s366, %s367
        %s369 = smul.addr %s368, 4
        %s370 = scalar_lea.vmem %s0, %s369
        %s371 = smul.u32 8, %s30
        %s372 = smul.u32 %s30, 8
        %s373 = ssub.s32 %s372, 1
        %p374 = scmp.gt.s32.totalorder %s373, 0
        %s375 = scalar_select %p374, %s373, 0
        %s376 = sadd.s32 %s30, 1
        %s377 = smul.u32 %s376, 8
        %p378 = scmp.lt.s32.totalorder %s377, 15
        %s379 = scalar_select %p378, %s377, 15
        %s380 = smul.u32 8, %s30
        %vm382 = vcmask 516096
        %vm383 = vsmask.f32 256
        %vm384 = vmand %vm382, %vm383
        %v385 = vld [vmem:[#allocation2] sm:$0x1]
        %v386 = vsel %vm384, 0, %v385
        %387 = vst [vmem:[#allocation2] sm:$0x1] %v386
        %v388 = vld [vmem:[#allocation2 + $0x10] sm:$0x1]
        %v389 = vsel %vm384, 0, %v388
        %390 = vst [vmem:[#allocation2 + $0x10] sm:$0x1] %v389
        %v391 = vld [vmem:[#allocation2 + $0x20] sm:$0x1]
        %v392 = vsel %vm384, 0, %v391
        %393 = vst [vmem:[#allocation2 + $0x20] sm:$0x1] %v392
        %v394 = vld [vmem:[#allocation2 + $0x30] sm:$0x1]
        %v395 = vsel %vm384, 0, %v394
        %396 = vst [vmem:[#allocation2 + $0x30] sm:$0x1] %v395
        %v397 = vld [vmem:[#allocation2 + $0x40] sm:$0x1]
        %v398 = vsel %vm384, 0, %v397
        %399 = vst [vmem:[#allocation2 + $0x40] sm:$0x1] %v398
        %v400 = vld [vmem:[#allocation2 + $0x50] sm:$0x1]
        %v401 = vsel %vm384, 0, %v400
        %402 = vst [vmem:[#allocation2 + $0x50] sm:$0x1] %v401
        %v403 = vld [vmem:[#allocation2 + $0x60] sm:$0x1]
        %v404 = vsel %vm384, 0, %v403
        %405 = vst [vmem:[#allocation2 + $0x60] sm:$0x1] %v404
        %v406 = vld [vmem:[#allocation2 + $0x70] sm:$0x1]
        %v407 = vsel %vm384, 0, %v406
        %408 = vst [vmem:[#allocation2 + $0x70] sm:$0x1] %v407
        %v409 = vld [vmem:[#allocation2 + $0x80] sm:$0x1]
        %v410 = vsel %vm384, 0, %v409
        %411 = vst [vmem:[#allocation2 + $0x80] sm:$0x1] %v410
        %v412 = vld [vmem:[#allocation2 + $0x90] sm:$0x1]
        %v413 = vsel %vm384, 0, %v412
        %414 = vst [vmem:[#allocation2 + $0x90] sm:$0x1] %v413
        %vm415 = vcmask 519171
        %vm416 = vsmask.f32 7950
        %vm417 = vmand %vm415, %vm416
        %v418 = vld [vmem:[#allocation2 + $0xc] sm:$0x8]
        %v419 = vsel %vm417, 0, %v418
        %420 = vst [vmem:[#allocation2 + $0xc] sm:$0x8] %v419
        %v421 = vld [vmem:[#allocation2 + $0x1c] sm:$0x8]
        %v422 = vsel %vm417, 0, %v421
        %423 = vst [vmem:[#allocation2 + $0x1c] sm:$0x8] %v422
        %v424 = vld [vmem:[#allocation2 + $0x2c] sm:$0x8]
        %v425 = vsel %vm417, 0, %v424
        %426 = vst [vmem:[#allocation2 + $0x2c] sm:$0x8] %v425
        %v427 = vld [vmem:[#allocation2 + $0x3c] sm:$0x8]
        %v428 = vsel %vm417, 0, %v427
        %429 = vst [vmem:[#allocation2 + $0x3c] sm:$0x8] %v428
        %v430 = vld [vmem:[#allocation2 + $0x4c] sm:$0x8]
        %v431 = vsel %vm417, 0, %v430
        %432 = vst [vmem:[#allocation2 + $0x4c] sm:$0x8] %v431
        %v433 = vld [vmem:[#allocation2 + $0x5c] sm:$0x8]
        %v434 = vsel %vm417, 0, %v433
        %435 = vst [vmem:[#allocation2 + $0x5c] sm:$0x8] %v434
        %v436 = vld [vmem:[#allocation2 + $0x6c] sm:$0x8]
        %v437 = vsel %vm417, 0, %v436
        %438 = vst [vmem:[#allocation2 + $0x6c] sm:$0x8] %v437
        %v439 = vld [vmem:[#allocation2 + $0x7c] sm:$0x8]
        %v440 = vsel %vm417, 0, %v439
        %441 = vst [vmem:[#allocation2 + $0x7c] sm:$0x8] %v440
        %v442 = vld [vmem:[#allocation2 + $0x8c] sm:$0x8]
        %v443 = vsel %vm417, 0, %v442
        %444 = vst [vmem:[#allocation2 + $0x8c] sm:$0x8] %v443
        %v445 = vld [vmem:[#allocation2 + $0x9c] sm:$0x8]
        %v446 = vsel %vm417, 0, %v445
        %447 = vst [vmem:[#allocation2 + $0x9c] sm:$0x8] %v446
        %v448 = vld [vmem:[%s370] sm:$0xf]
        %v449 = vld [vmem:[%s370 + $0x4] sm:$0xf]
        %v450 = vld [vmem:[%s370 + $0x8] sm:$0xf]
        %v451 = vld [vmem:[%s370 + $0xc] sm:$0xf]
        %v452 = vld [vmem:[%s370 + $0x10] sm:$0xf]
        %v453 = vld [vmem:[%s370 + $0x14] sm:$0xf]
        %v454 = vld [vmem:[%s370 + $0x18] sm:$0xf]
        %v455 = vld [vmem:[%s370 + $0x1c] sm:$0xf]
        %v456 = vld [vmem:[%s370 + $0x20] sm:$0xf]
        %v457 = vld [vmem:[%s370 + $0x24] sm:$0xf]
        %v458 = vld [vmem:[%s370 + $0x28] sm:$0xf]
        %v459 = vld [vmem:[%s370 + $0x2c] sm:$0xf]
        %v460 = vld [vmem:[%s370 + $0x30] sm:$0xf]
        %v461 = vld [vmem:[%s370 + $0x34] sm:$0xf]
        %v462 = vld [vmem:[%s370 + $0x38] sm:$0xf]
        %v463 = vld [vmem:[%s370 + $0x3c] sm:$0xf]
        %480 = vrot.lane.b32.xlu0 %v448, 64
        %v481 = vpop.permute.xlu0 %480
        %482 = vrot.lane.b32.xlu0 %v449, 64
        %v483 = vpop.permute.xlu0 %482
        %484 = vrot.lane.b32.xlu0 %v450, 64
        %v485 = vpop.permute.xlu0 %484
        %486 = vrot.lane.b32.xlu0 %v451, 64
        %v487 = vpop.permute.xlu0 %486
        %488 = vrot.lane.b32.xlu0 %v452, 64
        %v489 = vpop.permute.xlu0 %488
        %490 = vrot.lane.b32.xlu0 %v453, 64
        %v491 = vpop.permute.xlu0 %490
        %492 = vrot.lane.b32.xlu0 %v454, 64
        %v493 = vpop.permute.xlu0 %492
        %494 = vrot.lane.b32.xlu0 %v455, 64
        %v495 = vpop.permute.xlu0 %494
        %496 = vrot.lane.b32.xlu0 %v456, 64
        %v497 = vpop.permute.xlu0 %496
        %498 = vrot.lane.b32.xlu0 %v457, 64
        %v499 = vpop.permute.xlu0 %498
        %500 = vrot.lane.b32.xlu0 %v458, 64
        %v501 = vpop.permute.xlu0 %500
        %502 = vrot.lane.b32.xlu0 %v459, 64
        %v503 = vpop.permute.xlu0 %502
        %504 = vrot.lane.b32.xlu0 %v460, 64
        %v505 = vpop.permute.xlu0 %504
        %506 = vrot.lane.b32.xlu0 %v461, 64
        %v507 = vpop.permute.xlu0 %506
        %508 = vrot.lane.b32.xlu0 %v462, 64
        %v509 = vpop.permute.xlu0 %508
        %510 = vrot.lane.b32.xlu0 %v463, 64
        %v511 = vpop.permute.xlu0 %510
        %s528 = scalar_lea.vmem [#allocation2], 16
        %vm529 = vcmask 1043968
        %530 = vst.msk [vmem:[%s528] sm:$0xf] %vm529, %v481
        %531 = vst.msk [vmem:[%s528 + $0x8] sm:$0xf] %vm529, %v483
        %532 = vst.msk [vmem:[%s528 + $0x10] sm:$0xf] %vm529, %v485
        %533 = vst.msk [vmem:[%s528 + $0x18] sm:$0xf] %vm529, %v487
        %534 = vst.msk [vmem:[%s528 + $0x20] sm:$0xf] %vm529, %v489
        %535 = vst.msk [vmem:[%s528 + $0x28] sm:$0xf] %vm529, %v491
        %536 = vst.msk [vmem:[%s528 + $0x30] sm:$0xf] %vm529, %v493
        %537 = vst.msk [vmem:[%s528 + $0x38] sm:$0xf] %vm529, %v495
        %538 = vst.msk [vmem:[%s528 + $0x40] sm:$0xf] %vm529, %v497
        %539 = vst.msk [vmem:[%s528 + $0x48] sm:$0xf] %vm529, %v499
        %540 = vst.msk [vmem:[%s528 + $0x50] sm:$0xf] %vm529, %v501
        %541 = vst.msk [vmem:[%s528 + $0x58] sm:$0xf] %vm529, %v503
        %542 = vst.msk [vmem:[%s528 + $0x60] sm:$0xf] %vm529, %v505
        %543 = vst.msk [vmem:[%s528 + $0x68] sm:$0xf] %vm529, %v507
        %544 = vst.msk [vmem:[%s528 + $0x70] sm:$0xf] %vm529, %v509
        %545 = vst.msk [vmem:[%s528 + $0x78] sm:$0xf] %vm529, %v511
        %vm546 = vsmask.f32 4368
        %vm547 = vmor %vm383, %vm546
        %v549 = vshrl.u32 %v448, 16
        %v551 = vrot.slane %v549, 7
        %v552 = vshll.u32 %v448, 16
        %v554 = vor.u32 %v551, %v552
        %v555 = vrot.slane %v551, 4
        %v557 = vshrl.u32 %v449, 16
        %v559 = vrot.slane %v557, 7
        %v560 = vshll.u32 %v449, 16
        %v562 = vor.u32 %v559, %v560
        %v563 = vsel %vm547, %v555, %v562
        %v565 = vshrl.u32 %v450, 16
        %v567 = vrot.slane %v565, 7
        %v568 = vshll.u32 %v450, 16
        %v570 = vor.u32 %v567, %v568
        %v571 = vrot.slane %v567, 4
        %v573 = vshrl.u32 %v451, 16
        %v575 = vrot.slane %v573, 7
        %v576 = vshll.u32 %v451, 16
        %v578 = vor.u32 %v575, %v576
        %v579 = vsel %vm547, %v571, %v578
        %v581 = vshrl.u32 %v452, 16
        %v583 = vrot.slane %v581, 7
        %v584 = vshll.u32 %v452, 16
        %v586 = vor.u32 %v583, %v584
        %v587 = vrot.slane %v583, 4
        %v589 = vshrl.u32 %v453, 16
        %v591 = vrot.slane %v589, 7
        %v592 = vshll.u32 %v453, 16
        %v594 = vor.u32 %v591, %v592
        %v595 = vsel %vm547, %v587, %v594
        %v597 = vshrl.u32 %v454, 16
        %v599 = vrot.slane %v597, 7
        %v600 = vshll.u32 %v454, 16
        %v602 = vor.u32 %v599, %v600
        %v603 = vrot.slane %v599, 4
        %v605 = vshrl.u32 %v455, 16
        %v607 = vrot.slane %v605, 7
        %v608 = vshll.u32 %v455, 16
        %v610 = vor.u32 %v607, %v608
        %v611 = vsel %vm547, %v603, %v610
        %v613 = vshrl.u32 %v456, 16
        %v615 = vrot.slane %v613, 7
        %v616 = vshll.u32 %v456, 16
        %v618 = vor.u32 %v615, %v616
        %v619 = vrot.slane %v615, 4
        %v621 = vshrl.u32 %v457, 16
        %v623 = vrot.slane %v621, 7
        %v624 = vshll.u32 %v457, 16
        %v626 = vor.u32 %v623, %v624
        %v627 = vsel %vm547, %v619, %v626
        %v629 = vshrl.u32 %v458, 16
        %v631 = vrot.slane %v629, 7
        %v632 = vshll.u32 %v458, 16
        %v634 = vor.u32 %v631, %v632
        %v635 = vrot.slane %v631, 4
        %v637 = vshrl.u32 %v459, 16
        %v639 = vrot.slane %v637, 7
        %v640 = vshll.u32 %v459, 16
        %v642 = vor.u32 %v639, %v640
        %v643 = vsel %vm547, %v635, %v642
        %v645 = vshrl.u32 %v460, 16
        %v647 = vrot.slane %v645, 7
        %v648 = vshll.u32 %v460, 16
        %v650 = vor.u32 %v647, %v648
        %v651 = vrot.slane %v647, 4
        %v653 = vshrl.u32 %v461, 16
        %v655 = vrot.slane %v653, 7
        %v656 = vshll.u32 %v461, 16
        %v658 = vor.u32 %v655, %v656
        %v659 = vsel %vm547, %v651, %v658
        %v661 = vshrl.u32 %v462, 16
        %v663 = vrot.slane %v661, 7
        %v664 = vshll.u32 %v462, 16
        %v666 = vor.u32 %v663, %v664
        %v667 = vrot.slane %v663, 4
        %v669 = vshrl.u32 %v463, 16
        %v671 = vrot.slane %v669, 7
        %v672 = vshll.u32 %v463, 16
        %v674 = vor.u32 %v671, %v672
        %v675 = vsel %vm547, %v667, %v674
        %vm692 = vcmask 519168
        %vm693 = vsmask.f32 7938
        %vm694 = vmand %vm692, %vm693
        %v695 = vld [vmem:[%s528] sm:$0xf]
        %v696 = vsel %vm694, %v554, %v695
        %697 = vst [vmem:[%s528] sm:$0xf] %v696
        %vm698 = vcmask 519168
        %699 = vst.msk [vmem:[%s528 + $0x8] sm:$0xf] %vm698, %v563
        %v700 = vld [vmem:[%s528 + $0x10] sm:$0xf]
        %v701 = vsel %vm694, %v570, %v700
        %702 = vst [vmem:[%s528 + $0x10] sm:$0xf] %v701
        %703 = vst.msk [vmem:[%s528 + $0x18] sm:$0xf] %vm698, %v579
        %v704 = vld [vmem:[%s528 + $0x20] sm:$0xf]
        %v705 = vsel %vm694, %v586, %v704
        %706 = vst [vmem:[%s528 + $0x20] sm:$0xf] %v705
        %707 = vst.msk [vmem:[%s528 + $0x28] sm:$0xf] %vm698, %v595
        %v708 = vld [vmem:[%s528 + $0x30] sm:$0xf]
        %v709 = vsel %vm694, %v602, %v708
        %710 = vst [vmem:[%s528 + $0x30] sm:$0xf] %v709
        %711 = vst.msk [vmem:[%s528 + $0x38] sm:$0xf] %vm698, %v611
        %v712 = vld [vmem:[%s528 + $0x40] sm:$0xf]
        %v713 = vsel %vm694, %v618, %v712
        %714 = vst [vmem:[%s528 + $0x40] sm:$0xf] %v713
        %715 = vst.msk [vmem:[%s528 + $0x48] sm:$0xf] %vm698, %v627
        %v716 = vld [vmem:[%s528 + $0x50] sm:$0xf]
        %v717 = vsel %vm694, %v634, %v716
        %718 = vst [vmem:[%s528 + $0x50] sm:$0xf] %v717
        %719 = vst.msk [vmem:[%s528 + $0x58] sm:$0xf] %vm698, %v643
        %v720 = vld [vmem:[%s528 + $0x60] sm:$0xf]
        %v721 = vsel %vm694, %v650, %v720
        %722 = vst [vmem:[%s528 + $0x60] sm:$0xf] %v721
        %723 = vst.msk [vmem:[%s528 + $0x68] sm:$0xf] %vm698, %v659
        %v724 = vld [vmem:[%s528 + $0x70] sm:$0xf]
        %v725 = vsel %vm694, %v666, %v724
        %726 = vst [vmem:[%s528 + $0x70] sm:$0xf] %v725
        %727 = vst.msk [vmem:[%s528 + $0x78] sm:$0xf] %vm698, %v675
        %vm728 = vsmask.f32 3328
        %vm729 = vsmask.f32 7440
        %vm730 = vmor %vm728, %vm729
        %v731 = vrot.slane %v549, 4
        %v732 = vrot.slane %v552, 5
        %v733 = vor.u32 %v731, %v732
        %v734 = vrot.slane %v733, 4
        %v735 = vrot.slane %v560, 5
        %v736 = vsel %vm730, %v734, %v735
        %v737 = vrot.slane %v557, 4
        %v738 = vor.u32 %v737, %v735
        %v739 = vrot.slane %v738, 4
        %v740 = vrot.slane %v565, 4
        %v741 = vrot.slane %v568, 5
        %v742 = vor.u32 %v740, %v741
        %v743 = vrot.slane %v742, 4
        %v744 = vrot.slane %v576, 5
        %v745 = vsel %vm730, %v743, %v744
        %v746 = vrot.slane %v573, 4
        %v747 = vor.u32 %v746, %v744
        %v748 = vrot.slane %v747, 4
        %v749 = vrot.slane %v581, 4
        %v750 = vrot.slane %v584, 5
        %v751 = vor.u32 %v749, %v750
        %v752 = vrot.slane %v751, 4
        %v753 = vrot.slane %v592, 5
        %v754 = vsel %vm730, %v752, %v753
        %v755 = vrot.slane %v589, 4
        %v756 = vor.u32 %v755, %v753
        %v757 = vrot.slane %v756, 4
        %v758 = vrot.slane %v597, 4
        %v759 = vrot.slane %v600, 5
        %v760 = vor.u32 %v758, %v759
        %v761 = vrot.slane %v760, 4
        %v762 = vrot.slane %v608, 5
        %v763 = vsel %vm730, %v761, %v762
        %v764 = vrot.slane %v605, 4
        %v765 = vor.u32 %v764, %v762
        %v766 = vrot.slane %v765, 4
        %v767 = vrot.slane %v613, 4
        %v768 = vrot.slane %v616, 5
        %v769 = vor.u32 %v767, %v768
        %v770 = vrot.slane %v769, 4
        %v771 = vrot.slane %v624, 5
        %v772 = vsel %vm730, %v770, %v771
        %v773 = vrot.slane %v621, 4
        %v774 = vor.u32 %v773, %v771
        %v775 = vrot.slane %v774, 4
        %v776 = vrot.slane %v629, 4
        %v777 = vrot.slane %v632, 5
        %v778 = vor.u32 %v776, %v777
        %v779 = vrot.slane %v778, 4
        %v780 = vrot.slane %v640, 5
        %v781 = vsel %vm730, %v779, %v780
        %v782 = vrot.slane %v637, 4
        %v783 = vor.u32 %v782, %v780
        %v784 = vrot.slane %v783, 4
        %v785 = vrot.slane %v645, 4
        %v786 = vrot.slane %v648, 5
        %v787 = vor.u32 %v785, %v786
        %v788 = vrot.slane %v787, 4
        %v789 = vrot.slane %v656, 5
        %v790 = vsel %vm730, %v788, %v789
        %v791 = vrot.slane %v653, 4
        %v792 = vor.u32 %v791, %v789
        %v793 = vrot.slane %v792, 4
        %v794 = vrot.slane %v661, 4
        %v795 = vrot.slane %v664, 5
        %v796 = vor.u32 %v794, %v795
        %v797 = vrot.slane %v796, 4
        %v798 = vrot.slane %v672, 5
        %v799 = vsel %vm730, %v797, %v798
        %v800 = vrot.slane %v669, 4
        %v801 = vor.u32 %v800, %v798
        %v802 = vrot.slane %v801, 4
        %819 = vst.msk [vmem:[%s528 + $0x4] sm:$0xf] %vm698, %v736
        %vm820 = vmand %vm692, %vm728
        %v821 = vld [vmem:[%s528 + $0xc] sm:$0xf]
        %v822 = vsel %vm820, %v739, %v821
        %823 = vst [vmem:[%s528 + $0xc] sm:$0xf] %v822
        %824 = vst.msk [vmem:[%s528 + $0x14] sm:$0xf] %vm698, %v745
        %v825 = vld [vmem:[%s528 + $0x1c] sm:$0xf]
        %v826 = vsel %vm820, %v748, %v825
        %827 = vst [vmem:[%s528 + $0x1c] sm:$0xf] %v826
        %828 = vst.msk [vmem:[%s528 + $0x24] sm:$0xf] %vm698, %v754
        %v829 = vld [vmem:[%s528 + $0x2c] sm:$0xf]
        %v830 = vsel %vm820, %v757, %v829
        %831 = vst [vmem:[%s528 + $0x2c] sm:$0xf] %v830
        %832 = vst.msk [vmem:[%s528 + $0x34] sm:$0xf] %vm698, %v763
        %v833 = vld [vmem:[%s528 + $0x3c] sm:$0xf]
        %v834 = vsel %vm820, %v766, %v833
        %835 = vst [vmem:[%s528 + $0x3c] sm:$0xf] %v834
        %836 = vst.msk [vmem:[%s528 + $0x44] sm:$0xf] %vm698, %v772
        %v837 = vld [vmem:[%s528 + $0x4c] sm:$0xf]
        %v838 = vsel %vm820, %v775, %v837
        %839 = vst [vmem:[%s528 + $0x4c] sm:$0xf] %v838
        %840 = vst.msk [vmem:[%s528 + $0x54] sm:$0xf] %vm698, %v781
        %v841 = vld [vmem:[%s528 + $0x5c] sm:$0xf]
        %v842 = vsel %vm820, %v784, %v841
        %843 = vst [vmem:[%s528 + $0x5c] sm:$0xf] %v842
        %844 = vst.msk [vmem:[%s528 + $0x64] sm:$0xf] %vm698, %v790
        %v845 = vld [vmem:[%s528 + $0x6c] sm:$0xf]
        %v846 = vsel %vm820, %v793, %v845
        %847 = vst [vmem:[%s528 + $0x6c] sm:$0xf] %v846
        %848 = vst.msk [vmem:[%s528 + $0x74] sm:$0xf] %vm698, %v799
        %v849 = vld [vmem:[%s528 + $0x7c] sm:$0xf]
        %v850 = vsel %vm820, %v802, %v849
        %851 = vst [vmem:[%s528 + $0x7c] sm:$0xf] %v850
        %p852 = scmp.gt.s32.totalorder %s30, 0
        // Predicated region
        $region49: #{tpu_custom_call.1} parent=39 // pred_check
          %p853 = pneg %p852
        $region50: #{tpu_custom_call.1} parent=39 // pred_check_branch
          %855 = sbr.rel (%p853) target = $region52
        $region51: #{tpu_custom_call.1} parent=39 // pred_region
          %v856 = vld [vmem:[%s308] sm:$0xf]
          %v857 = vld [vmem:[%s308 + $0x4] sm:$0xf]
          %860 = vrot.lane.b32.xlu0 %v856, 64
          %v861 = vpop.permute.xlu0 %860
          %862 = vrot.lane.b32.xlu0 %v857, 64
          %v863 = vpop.permute.xlu0 %862
          %866 = vst.msk [vmem:[#allocation2] sm:$0xf] %vm529, %v861
          %867 = vst.msk [vmem:[#allocation2 + $0x8] sm:$0xf] %vm529, %v863
          %v869 = vshrl.u32 %v856, 16
          %v871 = vrot.slane %v869, 7
          %v872 = vshll.u32 %v856, 16
          %v874 = vor.u32 %v871, %v872
          %v875 = vrot.slane %v871, 4
          %v877 = vshrl.u32 %v857, 16
          %v879 = vrot.slane %v877, 7
          %v880 = vshll.u32 %v857, 16
          %v882 = vor.u32 %v879, %v880
          %v883 = vsel %vm547, %v875, %v882
          %v886 = vld [vmem:[#allocation2] sm:$0xf]
          %v887 = vsel %vm694, %v874, %v886
          %888 = vst [vmem:[#allocation2] sm:$0xf] %v887
          %889 = vst.msk [vmem:[#allocation2 + $0x8] sm:$0xf] %vm698, %v883
          %v890 = vrot.slane %v869, 4
          %v891 = vrot.slane %v872, 5
          %v892 = vor.u32 %v890, %v891
          %v893 = vrot.slane %v892, 4
          %v894 = vrot.slane %v880, 5
          %v895 = vsel %vm730, %v893, %v894
          %v896 = vrot.slane %v877, 4
          %v897 = vor.u32 %v896, %v894
          %v898 = vrot.slane %v897, 4
          %901 = vst.msk [vmem:[#allocation2 + $0x4] sm:$0xf] %vm698, %v895
          %v902 = vld [vmem:[#allocation2 + $0xc] sm:$0xf]
          %v903 = vsel %vm820, %v898, %v902
          %904 = vst [vmem:[#allocation2 + $0xc] sm:$0xf] %v903
        $region52: #{tpu_custom_call.1} parent=39 // pred_fallthru
          _
        %p905 = scmp.eq.s32.totalorder %s30, 0
        // Predicated region
        $region53: #{tpu_custom_call.1} parent=39 // pred_check
          %p906 = pneg %p905
        $region54: #{tpu_custom_call.1} parent=39 // pred_check_branch
          %908 = sbr.rel (%p906) target = $region56
        $region55: #{tpu_custom_call.1} parent=39 // pred_region
          %vm909 = vcmask 1043456
          %vm910 = vcmask 523268
          %vm911 = vmor %vm910, %vm909
          %912 = vst.msk [vmem:[#allocation2] sm:$0xff] %vm911, 0
          %913 = vst.msk [vmem:[#allocation2 + $0x8] sm:$0xff] %vm911, 0
        $region56: #{tpu_custom_call.1} parent=39 // pred_fallthru
          _
        %p914 = scmp.lt.s32.totalorder %s30, 1
        // Predicated region
        $region57: #{tpu_custom_call.1} parent=39 // pred_check
          %p915 = pneg %p914
        $region58: #{tpu_custom_call.1} parent=39 // pred_check_branch
          %917 = sbr.rel (%p915) target = $region60
        $region59: #{tpu_custom_call.1} parent=39 // pred_region
          %v918 = vld [vmem:[%s318] sm:$0xf]
          %v919 = vld [vmem:[%s318 + $0x4] sm:$0xf]
          %922 = vrot.lane.b32.xlu0 %v918, 64
          %v923 = vpop.permute.xlu0 %922
          %924 = vrot.lane.b32.xlu0 %v919, 64
          %v925 = vpop.permute.xlu0 %924
          %s928 = scalar_lea.vmem [#allocation2], 144
          %929 = vst.msk [vmem:[%s928] sm:$0xf] %vm529, %v923
          %930 = vst.msk [vmem:[%s928 + $0x8] sm:$0xf] %vm529, %v925
          %v932 = vshrl.u32 %v918, 16
          %v934 = vrot.slane %v932, 7
          %v935 = vshll.u32 %v918, 16
          %v937 = vor.u32 %v934, %v935
          %v938 = vrot.slane %v934, 4
          %v940 = vshrl.u32 %v919, 16
          %v942 = vrot.slane %v940, 7
          %v943 = vshll.u32 %v919, 16
          %v945 = vor.u32 %v942, %v943
          %v946 = vsel %vm547, %v938, %v945
          %v949 = vld [vmem:[%s928] sm:$0xf]
          %v950 = vsel %vm694, %v937, %v949
          %951 = vst [vmem:[%s928] sm:$0xf] %v950
          %952 = vst.msk [vmem:[%s928 + $0x8] sm:$0xf] %vm698, %v946
          %v953 = vrot.slane %v932, 4
          %v954 = vrot.slane %v935, 5
          %v955 = vor.u32 %v953, %v954
          %v956 = vrot.slane %v955, 4
          %v957 = vrot.slane %v943, 5
          %v958 = vsel %vm730, %v956, %v957
          %v959 = vrot.slane %v940, 4
          %v960 = vor.u32 %v959, %v957
          %v961 = vrot.slane %v960, 4
          %964 = vst.msk [vmem:[%s928 + $0x4] sm:$0xf] %vm698, %v958
          %v965 = vld [vmem:[%s928 + $0xc] sm:$0xf]
          %v966 = vsel %vm820, %v961, %v965
          %967 = vst [vmem:[%s928 + $0xc] sm:$0xf] %v966
        $region60: #{tpu_custom_call.1} parent=39 // pred_fallthru
          _
        %p968 = scmp.eq.s32.totalorder %s30, 1
        // Predicated region
        $region61: #{tpu_custom_call.1} parent=39 // pred_check
          %p969 = pneg %p968
        $region62: #{tpu_custom_call.1} parent=39 // pred_check_branch
          %971 = sbr.rel (%p969) target = $region64
        $region63: #{tpu_custom_call.1} parent=39 // pred_region
          %s972 = scalar_lea.vmem [#allocation2], 144
          %vm973 = vcmask 1043456
          %vm974 = vcmask 523268
          %vm975 = vmor %vm974, %vm973
          %976 = vst.msk [vmem:[%s972] sm:$0xff] %vm975, 0
          %977 = vst.msk [vmem:[%s972 + $0x8] sm:$0xff] %vm975, 0
        $region64: #{tpu_custom_call.1} parent=39 // pred_fallthru
          _
        %v978 = vld [vmem:[%s4] sm:$0x1]
        loop: start=0, step=1, limit=4
        $region65: #{tpu_custom_call.1} parent=39 // loop_pre_header
          _
        $region66: #{tpu_custom_call.1} parent=39 // loop_header
          %s980 = sphi 0, %s984
          %p981 = scmp.ge.s32.totalorder %s980, 4
        $region67: #{tpu_custom_call.1} parent=39 // loop_header_branch
          %983 = sbr.rel (%p981) target = $region71
        $region68: #{tpu_custom_call.1} parent=39 // loop_body
          %s985 = smul.u32 %s980, 2
          %s986 = smul.u32 %s985, 4
          %s987 = smul.addr %s986, 4
          %s988 = scalar_lea.vmem [#allocation2], %s987
          %v989 = vld [vmem:[%s988] sm:$0xff]
          %v990 = vld [vmem:[%s988 + $0x8] sm:$0xff]
          %v991 = vld [vmem:[%s988 + $0x10] sm:$0xff]
          %v992 = vld [vmem:[%s988 + $0x18] sm:$0xff]
          %v993 = vld [vmem:[%s3] sm:$0xf]
          %v994 = vld [vmem:[%s3 + $0x4] sm:$0xf]
          %v995 = vld [vmem:[%s3 + $0x8] sm:$0xf]
          %v996 = vld [vmem:[%s3 + $0xc] sm:$0xf]
          %v997 = vld [vmem:[%s3 + $0x10] sm:$0xf]
          %v998 = vld [vmem:[%s3 + $0x14] sm:$0xf]
          %v999 = vld [vmem:[%s3 + $0x18] sm:$0xf]
          %v1000 = vld [vmem:[%s3 + $0x1c] sm:$0xf]
          %v1001 = vld [vmem:[%s3 + $0x20] sm:$0xf]
          %v1002 = vld [vmem:[%s3 + $0x24] sm:$0xf]
          %v1003 = vld [vmem:[%s3 + $0x28] sm:$0xf]
          %v1004 = vld [vmem:[%s3 + $0x2c] sm:$0xf]
          %v1005 = vld [vmem:[%s3 + $0x30] sm:$0xf]
          %v1006 = vld [vmem:[%s3 + $0x34] sm:$0xf]
          %v1007 = vld [vmem:[%s3 + $0x38] sm:$0xf]
          %v1008 = vld [vmem:[%s3 + $0x3c] sm:$0xf]
          %v1009 = vld [vmem:[%s3 + $0x40] sm:$0xf]
          %v1010 = vld [vmem:[%s3 + $0x44] sm:$0xf]
          %v1011 = vld [vmem:[%s3 + $0x48] sm:$0xf]
          %v1012 = vld [vmem:[%s3 + $0x4c] sm:$0xf]
          %v1013 = vld [vmem:[%s3 + $0x50] sm:$0xf]
          %v1014 = vld [vmem:[%s3 + $0x54] sm:$0xf]
          %v1015 = vld [vmem:[%s3 + $0x58] sm:$0xf]
          %v1016 = vld [vmem:[%s3 + $0x5c] sm:$0xf]
          %s1017 = sadd.s32 %s985, 1
          %s1018 = smul.u32 %s1017, 4
          %s1019 = smul.addr %s1018, 4
          %s1020 = scalar_lea.vmem [#allocation2], %s1019
          %v1021 = vld [vmem:[%s1020] sm:$0xff]
          %v1022 = vld [vmem:[%s1020 + $0x8] sm:$0xff]
          %v1023 = vld [vmem:[%s1020 + $0x10] sm:$0xff]
          %v1024 = vld [vmem:[%s1020 + $0x18] sm:$0xff]
          %s1025 = scalar_lea.vmem %s3, 96
          %v1026 = vld [vmem:[%s1025] sm:$0xf]
          %v1027 = vld [vmem:[%s1025 + $0x4] sm:$0xf]
          %v1028 = vld [vmem:[%s1025 + $0x8] sm:$0xf]
          %v1029 = vld [vmem:[%s1025 + $0xc] sm:$0xf]
          %v1030 = vld [vmem:[%s1025 + $0x10] sm:$0xf]
          %v1031 = vld [vmem:[%s1025 + $0x14] sm:$0xf]
          %v1032 = vld [vmem:[%s1025 + $0x18] sm:$0xf]
          %v1033 = vld [vmem:[%s1025 + $0x1c] sm:$0xf]
          %v1034 = vld [vmem:[%s1025 + $0x20] sm:$0xf]
          %v1035 = vld [vmem:[%s1025 + $0x24] sm:$0xf]
          %v1036 = vld [vmem:[%s1025 + $0x28] sm:$0xf]
          %v1037 = vld [vmem:[%s1025 + $0x2c] sm:$0xf]
          %v1038 = vld [vmem:[%s1025 + $0x30] sm:$0xf]
          %v1039 = vld [vmem:[%s1025 + $0x34] sm:$0xf]
          %v1040 = vld [vmem:[%s1025 + $0x38] sm:$0xf]
          %v1041 = vld [vmem:[%s1025 + $0x3c] sm:$0xf]
          %v1042 = vld [vmem:[%s1025 + $0x40] sm:$0xf]
          %v1043 = vld [vmem:[%s1025 + $0x44] sm:$0xf]
          %v1044 = vld [vmem:[%s1025 + $0x48] sm:$0xf]
          %v1045 = vld [vmem:[%s1025 + $0x4c] sm:$0xf]
          %v1046 = vld [vmem:[%s1025 + $0x50] sm:$0xf]
          %v1047 = vld [vmem:[%s1025 + $0x54] sm:$0xf]
          %v1048 = vld [vmem:[%s1025 + $0x58] sm:$0xf]
          %v1049 = vld [vmem:[%s1025 + $0x5c] sm:$0xf]
          %v1054 = vunpack.c.l.b16 %v1021
          %v1055 = vunpack.c.h.b16 %v1021
          %v1056 = vunpack.c.l.b16 %v1022
          %v1057 = vunpack.c.h.b16 %v1022
          %v1058 = vunpack.c.l.b16 %v1023
          %v1059 = vunpack.c.h.b16 %v1023
          %v1060 = vunpack.c.l.b16 %v1024
          %v1061 = vunpack.c.h.b16 %v1024
          %v1062 = vpack.c.b16 %v1056, %v1054
          %v1063 = vpack.c.b16 %v1057, %v1055
          %v1064 = vpack.c.b16 %v1060, %v1058
          %v1065 = vpack.c.b16 %v1061, %v1059
          %v1092 = vunpack.c.l.b16 %v1026
          %v1093 = vunpack.c.l.b16 %v1027
          %v1094 = vunpack.c.l.b16 %v1028
          %v1095 = vunpack.c.l.b16 %v1029
          %v1096 = vunpack.c.l.b16 %v1030
          %v1097 = vunpack.c.l.b16 %v1031
          %v1098 = vunpack.c.l.b16 %v1032
          %v1099 = vunpack.c.l.b16 %v1033
          %v1100 = vunpack.c.l.b16 %v1034
          %v1101 = vunpack.c.l.b16 %v1035
          %v1102 = vunpack.c.l.b16 %v1036
          %v1103 = vunpack.c.l.b16 %v1037
          %v1104 = vunpack.c.l.b16 %v1038
          %v1105 = vunpack.c.l.b16 %v1039
          %v1106 = vunpack.c.l.b16 %v1040
          %v1107 = vunpack.c.l.b16 %v1041
          %v1108 = vunpack.c.l.b16 %v1042
          %v1109 = vunpack.c.l.b16 %v1043
          %v1110 = vunpack.c.l.b16 %v1044
          %v1111 = vunpack.c.l.b16 %v1045
          %v1112 = vunpack.c.l.b16 %v1046
          %v1113 = vunpack.c.l.b16 %v1047
          %v1114 = vunpack.c.l.b16 %v1048
          %v1115 = vunpack.c.l.b16 %v1049
          %v1116 = vpack.c.b16 %v1093, %v1092
          %v1117 = vpack.c.b16 %v1095, %v1094
          %v1118 = vpack.c.b16 %v1097, %v1096
          %v1119 = vpack.c.b16 %v1099, %v1098
          %v1120 = vpack.c.b16 %v1101, %v1100
          %v1121 = vpack.c.b16 %v1103, %v1102
          %v1122 = vpack.c.b16 %v1105, %v1104
          %v1123 = vpack.c.b16 %v1107, %v1106
          %v1124 = vpack.c.b16 %v1109, %v1108
          %v1125 = vpack.c.b16 %v1111, %v1110
          %v1126 = vpack.c.b16 %v1113, %v1112
          %v1127 = vpack.c.b16 %v1115, %v1114
          %vm1140 = vcmask 523264
          %v1142 = vsel %vm1140, %v1063, 0
          %v1145 = vsel %vm1140, %v1065, 0
          %1147 = vmatpush.bf16.msra.mxu0 %v1123
          %1148 = vmatpush.bf16.msra.mxu0 %v1122
          %1149 = vmatpush.bf16.msra.mxu0 %v1121
          %1150 = vmatpush.bf16.msra.mxu0 %v1120
          %1151 = vmatpush.bf16.msra.mxu0 %v1119
          %1152 = vmatpush.bf16.msra.mxu0 %v1118
          %1153 = vmatpush.bf16.msra.mxu0 %v1117
          %1154 = vmatpush.bf16.msra.mxu0 %v1116
          %1155 = vmatmul.bf16.gmra.mxu0 %v1062
          %v1156 = vpop.f32.mrf.mxu0
          %v1157 = vadd.f32 0.0, %v1156
          %v1158 = vpop.f32.mrf.mxu0
          %v1159 = vadd.f32 0.0, %v1158
          %1160 = vmatmul.bf16.gmra.mxu0 %v1064
          %v1161 = vpop.f32.mrf.mxu0
          %v1162 = vadd.f32 0.0, %v1161
          %v1163 = vpop.f32.mrf.mxu0
          %v1164 = vadd.f32 0.0, %v1163
          %1165 = vdwg.mxu0
          %1166 = vmatpush.bf16.msra.mxu0 0
          %1167 = vmatpush.bf16.msra.mxu0 0
          %1168 = vmatpush.bf16.msra.mxu0 0
          %1169 = vmatpush.bf16.msra.mxu0 0
          %1170 = vmatpush.bf16.msra.mxu0 %v1127
          %1171 = vmatpush.bf16.msra.mxu0 %v1126
          %1172 = vmatpush.bf16.msra.mxu0 %v1125
          %1173 = vmatpush.bf16.msra.mxu0 %v1124
          %1174 = vmatmul.bf16.gmra.mxu0 %v1142
          %v1175 = vpop.f32.mrf.mxu0
          %v1176 = vadd.f32 %v1157, %v1175
          %v1177 = vpop.f32.mrf.mxu0
          %v1178 = vadd.f32 %v1159, %v1177
          %1179 = vmatmul.bf16.gmra.mxu0 %v1145
          %v1180 = vpop.f32.mrf.mxu0
          %v1181 = vadd.f32 %v1162, %v1180
          %v1182 = vpop.f32.mrf.mxu0
          %v1183 = vadd.f32 %v1164, %v1182
          %1184 = vdwg.mxu0
          %v1189 = vunpack.c.l.b16 %v989
          %v1190 = vunpack.c.h.b16 %v989
          %v1191 = vunpack.c.l.b16 %v990
          %v1192 = vunpack.c.h.b16 %v990
          %v1193 = vunpack.c.l.b16 %v991
          %v1194 = vunpack.c.h.b16 %v991
          %v1195 = vunpack.c.l.b16 %v992
          %v1196 = vunpack.c.h.b16 %v992
          %v1197 = vpack.c.b16 %v1191, %v1189
          %v1198 = vpack.c.b16 %v1192, %v1190
          %v1199 = vpack.c.b16 %v1195, %v1193
          %v1200 = vpack.c.b16 %v1196, %v1194
          %v1227 = vunpack.c.l.b16 %v993
          %v1228 = vunpack.c.l.b16 %v994
          %v1229 = vunpack.c.l.b16 %v995
          %v1230 = vunpack.c.l.b16 %v996
          %v1231 = vunpack.c.l.b16 %v997
          %v1232 = vunpack.c.l.b16 %v998
          %v1233 = vunpack.c.l.b16 %v999
          %v1234 = vunpack.c.l.b16 %v1000
          %v1235 = vunpack.c.l.b16 %v1001
          %v1236 = vunpack.c.l.b16 %v1002
          %v1237 = vunpack.c.l.b16 %v1003
          %v1238 = vunpack.c.l.b16 %v1004
          %v1239 = vunpack.c.l.b16 %v1005
          %v1240 = vunpack.c.l.b16 %v1006
          %v1241 = vunpack.c.l.b16 %v1007
          %v1242 = vunpack.c.l.b16 %v1008
          %v1243 = vunpack.c.l.b16 %v1009
          %v1244 = vunpack.c.l.b16 %v1010
          %v1245 = vunpack.c.l.b16 %v1011
          %v1246 = vunpack.c.l.b16 %v1012
          %v1247 = vunpack.c.l.b16 %v1013
          %v1248 = vunpack.c.l.b16 %v1014
          %v1249 = vunpack.c.l.b16 %v1015
          %v1250 = vunpack.c.l.b16 %v1016
          %v1251 = vpack.c.b16 %v1228, %v1227
          %v1252 = vpack.c.b16 %v1230, %v1229
          %v1253 = vpack.c.b16 %v1232, %v1231
          %v1254 = vpack.c.b16 %v1234, %v1233
          %v1255 = vpack.c.b16 %v1236, %v1235
          %v1256 = vpack.c.b16 %v1238, %v1237
          %v1257 = vpack.c.b16 %v1240, %v1239
          %v1258 = vpack.c.b16 %v1242, %v1241
          %v1259 = vpack.c.b16 %v1244, %v1243
          %v1260 = vpack.c.b16 %v1246, %v1245
          %v1261 = vpack.c.b16 %v1248, %v1247
          %v1262 = vpack.c.b16 %v1250, %v1249
          %v1276 = vsel %vm1140, %v1198, 0
          %v1279 = vsel %vm1140, %v1200, 0
          %1281 = vmatpush.bf16.msra.mxu0 %v1258
          %1282 = vmatpush.bf16.msra.mxu0 %v1257
          %1283 = vmatpush.bf16.msra.mxu0 %v1256
          %1284 = vmatpush.bf16.msra.mxu0 %v1255
          %1285 = vmatpush.bf16.msra.mxu0 %v1254
          %1286 = vmatpush.bf16.msra.mxu0 %v1253
          %1287 = vmatpush.bf16.msra.mxu0 %v1252
          %1288 = vmatpush.bf16.msra.mxu0 %v1251
          %1289 = vmatmul.bf16.gmra.mxu0 %v1197
          %v1290 = vpop.f32.mrf.mxu0
          %v1291 = vadd.f32 %v1176, %v1290
          %v1292 = vpop.f32.mrf.mxu0
          %v1293 = vadd.f32 %v1178, %v1292
          %1294 = vmatmul.bf16.gmra.mxu0 %v1199
          %v1295 = vpop.f32.mrf.mxu0
          %v1296 = vadd.f32 %v1181, %v1295
          %v1297 = vpop.f32.mrf.mxu0
          %v1298 = vadd.f32 %v1183, %v1297
          %1299 = vdwg.mxu0
          %1300 = vmatpush.bf16.msra.mxu0 0
          %1301 = vmatpush.bf16.msra.mxu0 0
          %1302 = vmatpush.bf16.msra.mxu0 0
          %1303 = vmatpush.bf16.msra.mxu0 0
          %1304 = vmatpush.bf16.msra.mxu0 %v1262
          %1305 = vmatpush.bf16.msra.mxu0 %v1261
          %1306 = vmatpush.bf16.msra.mxu0 %v1260
          %1307 = vmatpush.bf16.msra.mxu0 %v1259
          %1308 = vmatmul.bf16.gmra.mxu0 %v1276
          %v1309 = vpop.f32.mrf.mxu0
          %v1310 = vadd.f32 %v1291, %v1309
          %v1311 = vpop.f32.mrf.mxu0
          %v1312 = vadd.f32 %v1293, %v1311
          %1313 = vmatmul.bf16.gmra.mxu0 %v1279
          %v1314 = vpop.f32.mrf.mxu0
          %v1315 = vadd.f32 %v1296, %v1314
          %v1316 = vpop.f32.mrf.mxu0
          %v1317 = vadd.f32 %v1298, %v1316
          %1318 = vdwg.mxu0
          %s1319 = sadd.s32 %s985, 2
          %s1320 = smul.u32 %s1319, 4
          %s1321 = smul.addr %s1320, 4
          %s1322 = scalar_lea.vmem [#allocation2], %s1321
          %v1323 = vld [vmem:[%s1322] sm:$0xff]
          %v1324 = vld [vmem:[%s1322 + $0x8] sm:$0xff]
          %v1325 = vld [vmem:[%s1322 + $0x10] sm:$0xff]
          %v1326 = vld [vmem:[%s1322 + $0x18] sm:$0xff]
          %s1327 = scalar_lea.vmem %s3, 192
          %v1328 = vld [vmem:[%s1327] sm:$0xf]
          %v1329 = vld [vmem:[%s1327 + $0x4] sm:$0xf]
          %v1330 = vld [vmem:[%s1327 + $0x8] sm:$0xf]
          %v1331 = vld [vmem:[%s1327 + $0xc] sm:$0xf]
          %v1332 = vld [vmem:[%s1327 + $0x10] sm:$0xf]
          %v1333 = vld [vmem:[%s1327 + $0x14] sm:$0xf]
          %v1334 = vld [vmem:[%s1327 + $0x18] sm:$0xf]
          %v1335 = vld [vmem:[%s1327 + $0x1c] sm:$0xf]
          %v1336 = vld [vmem:[%s1327 + $0x20] sm:$0xf]
          %v1337 = vld [vmem:[%s1327 + $0x24] sm:$0xf]
          %v1338 = vld [vmem:[%s1327 + $0x28] sm:$0xf]
          %v1339 = vld [vmem:[%s1327 + $0x2c] sm:$0xf]
          %v1340 = vld [vmem:[%s1327 + $0x30] sm:$0xf]
          %v1341 = vld [vmem:[%s1327 + $0x34] sm:$0xf]
          %v1342 = vld [vmem:[%s1327 + $0x38] sm:$0xf]
          %v1343 = vld [vmem:[%s1327 + $0x3c] sm:$0xf]
          %v1344 = vld [vmem:[%s1327 + $0x40] sm:$0xf]
          %v1345 = vld [vmem:[%s1327 + $0x44] sm:$0xf]
          %v1346 = vld [vmem:[%s1327 + $0x48] sm:$0xf]
          %v1347 = vld [vmem:[%s1327 + $0x4c] sm:$0xf]
          %v1348 = vld [vmem:[%s1327 + $0x50] sm:$0xf]
          %v1349 = vld [vmem:[%s1327 + $0x54] sm:$0xf]
          %v1350 = vld [vmem:[%s1327 + $0x58] sm:$0xf]
          %v1351 = vld [vmem:[%s1327 + $0x5c] sm:$0xf]
          %v1356 = vunpack.c.l.b16 %v1323
          %v1357 = vunpack.c.h.b16 %v1323
          %v1358 = vunpack.c.l.b16 %v1324
          %v1359 = vunpack.c.h.b16 %v1324
          %v1360 = vunpack.c.l.b16 %v1325
          %v1361 = vunpack.c.h.b16 %v1325
          %v1362 = vunpack.c.l.b16 %v1326
          %v1363 = vunpack.c.h.b16 %v1326
          %v1364 = vpack.c.b16 %v1358, %v1356
          %v1365 = vpack.c.b16 %v1359, %v1357
          %v1366 = vpack.c.b16 %v1362, %v1360
          %v1367 = vpack.c.b16 %v1363, %v1361
          %v1394 = vunpack.c.l.b16 %v1328
          %v1395 = vunpack.c.l.b16 %v1329
          %v1396 = vunpack.c.l.b16 %v1330
          %v1397 = vunpack.c.l.b16 %v1331
          %v1398 = vunpack.c.l.b16 %v1332
          %v1399 = vunpack.c.l.b16 %v1333
          %v1400 = vunpack.c.l.b16 %v1334
          %v1401 = vunpack.c.l.b16 %v1335
          %v1402 = vunpack.c.l.b16 %v1336
          %v1403 = vunpack.c.l.b16 %v1337
          %v1404 = vunpack.c.l.b16 %v1338
          %v1405 = vunpack.c.l.b16 %v1339
          %v1406 = vunpack.c.l.b16 %v1340
          %v1407 = vunpack.c.l.b16 %v1341
          %v1408 = vunpack.c.l.b16 %v1342
          %v1409 = vunpack.c.l.b16 %v1343
          %v1410 = vunpack.c.l.b16 %v1344
          %v1411 = vunpack.c.l.b16 %v1345
          %v1412 = vunpack.c.l.b16 %v1346
          %v1413 = vunpack.c.l.b16 %v1347
          %v1414 = vunpack.c.l.b16 %v1348
          %v1415 = vunpack.c.l.b16 %v1349
          %v1416 = vunpack.c.l.b16 %v1350
          %v1417 = vunpack.c.l.b16 %v1351
          %v1418 = vpack.c.b16 %v1395, %v1394
          %v1419 = vpack.c.b16 %v1397, %v1396
          %v1420 = vpack.c.b16 %v1399, %v1398
          %v1421 = vpack.c.b16 %v1401, %v1400
          %v1422 = vpack.c.b16 %v1403, %v1402
          %v1423 = vpack.c.b16 %v1405, %v1404
          %v1424 = vpack.c.b16 %v1407, %v1406
          %v1425 = vpack.c.b16 %v1409, %v1408
          %v1426 = vpack.c.b16 %v1411, %v1410
          %v1427 = vpack.c.b16 %v1413, %v1412
          %v1428 = vpack.c.b16 %v1415, %v1414
          %v1429 = vpack.c.b16 %v1417, %v1416
          %v1443 = vsel %vm1140, %v1365, 0
          %v1446 = vsel %vm1140, %v1367, 0
          %1448 = vmatpush.bf16.msra.mxu0 %v1425
          %1449 = vmatpush.bf16.msra.mxu0 %v1424
          %1450 = vmatpush.bf16.msra.mxu0 %v1423
          %1451 = vmatpush.bf16.msra.mxu0 %v1422
          %1452 = vmatpush.bf16.msra.mxu0 %v1421
          %1453 = vmatpush.bf16.msra.mxu0 %v1420
          %1454 = vmatpush.bf16.msra.mxu0 %v1419
          %1455 = vmatpush.bf16.msra.mxu0 %v1418
          %1456 = vmatmul.bf16.gmra.mxu0 %v1364
          %v1457 = vpop.f32.mrf.mxu0
          %v1458 = vadd.f32 0.0, %v1457
          %v1459 = vpop.f32.mrf.mxu0
          %v1460 = vadd.f32 0.0, %v1459
          %1461 = vmatmul.bf16.gmra.mxu0 %v1366
          %v1462 = vpop.f32.mrf.mxu0
          %v1463 = vadd.f32 0.0, %v1462
          %v1464 = vpop.f32.mrf.mxu0
          %v1465 = vadd.f32 0.0, %v1464
          %1466 = vdwg.mxu0
          %1467 = vmatpush.bf16.msra.mxu0 0
          %1468 = vmatpush.bf16.msra.mxu0 0
          %1469 = vmatpush.bf16.msra.mxu0 0
          %1470 = vmatpush.bf16.msra.mxu0 0
          %1471 = vmatpush.bf16.msra.mxu0 %v1429
          %1472 = vmatpush.bf16.msra.mxu0 %v1428
          %1473 = vmatpush.bf16.msra.mxu0 %v1427
          %1474 = vmatpush.bf16.msra.mxu0 %v1426
          %1475 = vmatmul.bf16.gmra.mxu0 %v1443
          %v1476 = vpop.f32.mrf.mxu0
          %v1477 = vadd.f32 %v1458, %v1476
          %v1478 = vpop.f32.mrf.mxu0
          %v1479 = vadd.f32 %v1460, %v1478
          %1480 = vmatmul.bf16.gmra.mxu0 %v1446
          %v1481 = vpop.f32.mrf.mxu0
          %v1482 = vadd.f32 %v1463, %v1481
          %v1483 = vpop.f32.mrf.mxu0
          %v1484 = vadd.f32 %v1465, %v1483
          %1485 = vdwg.mxu0
          %v1486 = vadd.f32 %v1310, %v1477
          %v1487 = vadd.f32 %v1312, %v1479
          %v1488 = vadd.f32 %v1315, %v1482
          %v1489 = vadd.f32 %v1317, %v1484
          %v1491 = vperm.slane %v978, 0
          %v1493 = vadd.f32 %v1486, %v1491
          %v1494 = vadd.f32 %v1487, %v1491
          %v1495 = vadd.f32 %v1488, %v1491
          %v1496 = vadd.f32 %v1489, %v1491
          %v1497 = vmax.f32 %v1493, 0.0
          %v1498 = vmax.f32 %v1494, 0.0
          %v1499 = vmax.f32 %v1495, 0.0
          %v1500 = vmax.f32 %v1496, 0.0
          %v1501 = vpack.c.bf16 %v1497, %v1497
          %v1502 = vpack.c.bf16 %v1498, %v1498
          %v1503 = vpack.c.bf16 %v1499, %v1499
          %v1504 = vpack.c.bf16 %v1500, %v1500
          %s1505 = smul.u32 %s985, 2
          %s1506 = smul.addr %s1505, 4
          %s1507 = scalar_lea.vmem %s360, %s1506 [#allocation9]
          %1508 = vst.msk [vmem:[%s1507] sm:$0xf] %vm698, %v1501
          %1509 = vst.msk [vmem:[%s1507 + $0x4] sm:$0xf] %vm698, %v1502
          %1510 = vst.msk [vmem:[%s1507 + $0x8] sm:$0xf] %vm698, %v1503
          %1511 = vst.msk [vmem:[%s1507 + $0xc] sm:$0xf] %vm698, %v1504
        $region69: #{tpu_custom_call.1} parent=39 // loop_footer
          %s984 = sadd.s32 1, %s980
        $region70: #{tpu_custom_call.1} parent=39 // loop_footer_branch
          %979 = sbr.rel target = $region66
        $region71: #{tpu_custom_call.1} parent=39 // loop_exit
          _
        %s1512 = sand.u32 %s189, 1
        %s1513 = scalar_lea.sflag [#allocation6], %s1512
        %s1514 = sand.u32 %s189, 1
        %s1515 = smul.addr %s1514, 64
        %s1516 = scalar_lea.vmem [#allocation9], %s1515
        // Predicated region
        $region72: #{tpu_custom_call.1} parent=39 // pred_check
          %p1517 = pneg %p199
        $region73: #{tpu_custom_call.1} parent=39 // pred_check_branch
          %1519 = sbr.rel (%p1517) target = $region75
        $region74: #{tpu_custom_call.1} parent=39 // pred_region
          %s1520 = smul.u32 8, %s30
          %1522 = vsyncadd %s1513, 0
          %s1523 = smul.addr %s1520, 2
          %s1524 = smul.addr %s29, 32
          %s1525 = sadd.s32 %s1523, %s1524
          %s1526 = smul.addr %s1525, 4
          %s1527 = scalar_lea.hbm %s5, %s1526
          %s1528 = sshll.u32 %s1516, 4
          %s1529 = int_to_ptr.vmem [resolvable:$true] %s1528
          %s1530 = sshll.u32 %s1527, 4
          %s1531 = int_to_ptr.hbm [resolvable:$true] %s1530
          %1536 = dma.vmem_to_hbm [thread:$0]  %s1529, 1024, %s1531, %s1513, 64, 64, 4
        $region75: #{tpu_custom_call.1} parent=39 // pred_fallthru
          _
      $region40: #{tpu_custom_call.1} parent=5 // pred_fallthru
        _
      %p1537 = scmp.le.s32.totalorder 2, %s20
      // Predicated region
      $region76: #{tpu_custom_call.1} parent=5 // pred_check
        %p1538 = pneg %p1537
      $region77: #{tpu_custom_call.1} parent=5 // pred_check_branch
        %1540 = sbr.rel (%p1538) target = $region79
      $region78: #{tpu_custom_call.1} parent=5 // pred_region
        %s1541 = ssub.s32 %s20, 2
        // Predicated region
        $region80: #{tpu_custom_call.1} parent=78 // pred_check
          %p1542 = pneg %p205
        $region81: #{tpu_custom_call.1} parent=78 // pred_check_branch
          %1544 = sbr.rel (%p1542) target = $region83
        $region82: #{tpu_custom_call.1} parent=78 // pred_region
          %s1545 = sand.u32 %s190, 1
          %s1546 = scalar_lea.sflag [#allocation6], %s1545
          %s1547 = sand.u32 %s190, 1
          %s1548 = smul.addr %s1547, 64
          %s1549 = scalar_lea.vmem [#allocation9], %s1548
          %1551 = dma.done %s1546, 1024
        $region83: #{tpu_custom_call.1} parent=78 // pred_fallthru
          _
      $region79: #{tpu_custom_call.1} parent=5 // pred_fallthru
        _
    $region6: #{tpu_custom_call.1} parent=1 // loop_footer
      %s24 = sadd.s32 1, %s20
    $region7: #{tpu_custom_call.1} parent=1 // loop_footer_branch
      %19 = sbr.rel target = $region3
    $region8: #{tpu_custom_call.1} parent=1 // loop_exit
      _
    %1552 = vsyncpa [#allocation5], 1
    %s1553 = scalar_lea.sflag [#allocation5], 1
    %1554 = vsyncpa %s1553, 1
    %1555 = vsyncpa [#allocation8], 1
    %s1556 = scalar_lea.sflag [#allocation8], 1
    %1557 = vsyncpa %s1556, 1
    %1558 = vsyncpa [#allocation6], 1
    %s1559 = scalar_lea.sflag [#allocation6], 1
    %1560 = vsyncpa %s1559, 1

</llo_original>
